<compile_context>
chip_gen: v6e
topology: v6e:2x2x1
jax: 0.10.0
libtpu: 0.0.40
codegen_flags: <defaults>
</compile_context>

<pallas_src>
from itertools import product

import numpy as np
import jax
import jax.numpy as jnp
from jax import lax
from jax.experimental import pallas as pl
from jax.experimental.pallas import tpu as pltpu


def _axis_weights(p_ref, coord):
    """Per-axis bucketize + scattered trilinear corner weights.

    p_ref : (G, 1) sorted grid coordinates (VMEM ref).
    coord : (1, TN) query coordinates along this axis.

    Returns:
      w       : (G, TN) corner weights scattered at idx_left / idx_right
                (idx_left carries dist_right, idx_right carries dist_left;
                the two add when the indices coincide, which exactly matches
                the torch 8-corner sum in the degenerate-cell case).
      overall : (1, TN) dist_left + dist_right (denominator factor).
    """
    p = p_ref[...]                                     # (G, 1)
    g = p.shape[0]
    tn = coord.shape[1]

    # torch.bucketize(x, p) (right=False) == #{grid points strictly < x}.
    # TODO(synk): for uniform (linspace) grids this compare+reduce and the two
    # one-hot p_left/p_right reductions can be replaced by the closed form
    # idx = clamp(ceil((x - p0)/dx)), p = p0 + idx*dx; kept general so
    # non-uniform grids remain supported (and exact vs. the torch reference).
    lt = (p < coord).astype(jnp.int32)                 # (G, TN)
    idx_right = jnp.sum(lt, axis=0, keepdims=True)     # (1, TN) int32
    idx_right = jnp.minimum(idx_right, g - 1)
    idx_left = jnp.clip(idx_right - 1, 0, g - 1)

    row = lax.broadcasted_iota(jnp.int32, (g, tn), 0)
    m_left = row == idx_left                           # (G, TN)
    m_right = row == idx_right

    p_left = jnp.sum(jnp.where(m_left, p, 0.0), axis=0, keepdims=True)
    p_right = jnp.sum(jnp.where(m_right, p, 0.0), axis=0, keepdims=True)

    d_left = jnp.maximum(coord - p_left, 0.0)
    d_right = jnp.maximum(p_right - coord, 0.0)
    both_zero = (d_left == 0.0) & (d_right == 0.0)
    d_left = jnp.where(both_zero, 1.0, d_left)
    d_right = jnp.where(both_zero, 1.0, d_right)

    w = jnp.where(m_left, d_right, 0.0) + jnp.where(m_right, d_left, 0.0)
    return w, d_left + d_right


def sdf_interp_kernel(tinv_ref, pts_ref, xg_ref, yg_ref, zg_ref, vals_ref, o_ref):
    pts = pts_ref[...]                                 # (3, TN)
    xs = pts[0:1, :]
    ys = pts[1:2, :]
    zs = pts[2:3, :]

    # Rigid transform into object frame: p_obj = R_inv @ p + t_inv
    xo = tinv_ref[0, 0] * xs + tinv_ref[0, 1] * ys + tinv_ref[0, 2] * zs + tinv_ref[0, 3]
    yo = tinv_ref[1, 0] * xs + tinv_ref[1, 1] * ys + tinv_ref[1, 2] * zs + tinv_ref[1, 3]
    zo = tinv_ref[2, 0] * xs + tinv_ref[2, 1] * ys + tinv_ref[2, 2] * zs + tinv_ref[2, 3]

    wx, ovl_x = _axis_weights(xg_ref, xo)              # (Gx, TN), (1, TN)
    wy, ovl_y = _axis_weights(yg_ref, yo)              # (Gy, TN), (1, TN)
    wz, ovl_z = _axis_weights(zg_ref, zo)              # (Gz, TN), (1, TN)

    gy = wy.shape[0]
    gz = wz.shape[0]
    tn = wy.shape[1]

    # Pure sublane replication (no MXU): build the flattened yz corner weights
    #   wyz[iy*gz + iz, n] = wy[iy, n] * wz[iz, n]
    # matching the row-major reshape of the SDF volume (flat = iy*gz + iz).
    # (This replaces the previous Ey/Ez expansion matmuls — those had the same
    #  MAC volume as the real contraction below but contraction depth << MXU.)
    wyz = (wy[:, None, :] * wz[None, :, :]).reshape(gy * gz, tn)   # (Gy*Gz, TN)

    # Single MXU contraction of the whole G^3 trilinear term.
    # NOTE: keep f32 operands — bf16 would violate the 1e-4 tolerance.
    tmp = jnp.dot(vals_ref[...], wyz, preferred_element_type=jnp.float32)   # (Gx, TN)
    num = jnp.sum(tmp * wx, axis=0, keepdims=True)                          # (1, TN)

    den = ovl_x * ovl_y * ovl_z
    o_ref[...] = (num * pl.reciprocal(den, approx=False)).astype(o_ref.dtype)


def _round_up(a, m):
    return ((a + m - 1) // m) * m


def _choose_tile_n(k, gy, gz):
    """Derive TILE_N from grid resolution / point count (multiple of 128)."""
    # Cap so the live (Gy*Gz, TN) f32 intermediates (wyz + broadcast operands)
    # stay under ~16 MiB (conservative for v7x: 64 MiB VMEM, 32 MiB scoped).
    budget = 16 * 1024 * 1024
    per_point_bytes = 3 * gy * gz * 4
    max_by_vmem = max(128, budget // max(per_point_bytes, 1))
    tile = min(2048, max_by_vmem)
    # Keep >= 2 grid steps when there is enough work (v7x has 2 TensorCores
    # and the point-tile axis is marked "parallel").
    if k > 256:
        tile = min(tile, _round_up((k + 1) // 2, 128))
    tile = max(128, (tile // 128) * 128)
    return tile


def sdf_interp_forward(x, sdf_grid, x_grid, y_grid, z_grid, sdf_map_pose,
                       tile_n=None):
    """x: (n_rays, n_samples, 3). Returns flat (n_rays*n_samples,) SDF values."""
    n_rays, n_samples, _ = x.shape
    k = n_rays * n_samples

    gx, gy, gz = x_grid.shape[0], y_grid.shape[0], z_grid.shape[0]
    if tile_n is None:
        tile_n = _choose_tile_n(k, gy, gz)

    pts = x.reshape(-1, 3).astype(jnp.float32)
    kp = _round_up(k, tile_n)
    pts = jnp.pad(pts, ((0, kp - k), (0, 0)))
    pts_t = jnp.transpose(pts)                         # (3, Kp): coord-major, lane-dense

    t_inv = jnp.linalg.inv(sdf_map_pose.astype(jnp.float32))[:3, :]        # (3, 4)

    xg = x_grid.reshape(gx, 1).astype(jnp.float32)
    yg = y_grid.reshape(gy, 1).astype(jnp.float32)
    zg = z_grid.reshape(gz, 1).astype(jnp.float32)

    # Lane-dense SDF values: (Gx, Gy*Gz); row-major so flat index = iy*gz + iz.
    v2d = sdf_grid.reshape(gx, gy * gz).astype(jnp.float32)

    # Grid-constant inputs: constant block index -> DMA'd once.  For non-toy
    # SDF volumes single-buffer them so the volume isn't held twice in VMEM.
    const_kw = {}
    const_bufs = 2
    if gx * gy * gz * 4 >= (1 << 20):
        const_kw = dict(pipeline_mode=pl.Buffered(1))
        const_bufs = 1

    # Explicit VMEM budget once we exceed the default scoped limit (~32 MiB).
    vmem_est = (
        const_bufs * 4 * (gx * gy * gz + gx + gy + gz)     # constants
        + 2 * 4 * (3 * tile_n + tile_n)                    # double-buffered pts/out tiles
        + 4 * tile_n * (4 * gy * gz + 2 * gx + 16)         # live intermediates
    )
    cp_kwargs = dict(
        # Point tiles are fully independent -> shardable across both TCs on v7x.
        dimension_semantics=("parallel",),
    )
    if vmem_est > (30 << 20):
        cp_kwargs["vmem_limit_bytes"] = min(int(vmem_est * 5 // 4), 64 << 20)

    out = pl.pallas_call(
        sdf_interp_kernel,
        out_shape=jax.ShapeDtypeStruct((1, kp), jnp.float32),
        grid_spec=pltpu.PrefetchScalarGridSpec(
            num_scalar_prefetch=0,
            grid=(kp // tile_n,),
            in_specs=[
                # T_inv scalars live in SMEM.
                pl.BlockSpec(memory_space=pltpu.MemorySpace.SMEM),
                # Points: lane-dense (3, TILE_N) tile per grid step.
                pl.BlockSpec((3, tile_n), lambda i: (0, i)),
                # Grid-constant inputs.
                pl.BlockSpec((gx, 1), lambda i: (0, 0), **const_kw),        # x grid pts
                pl.BlockSpec((gy, 1), lambda i: (0, 0), **const_kw),        # y grid pts
                pl.BlockSpec((gz, 1), lambda i: (0, 0), **const_kw),        # z grid pts
                pl.BlockSpec((gx, gy * gz), lambda i: (0, 0), **const_kw),  # SDF values
            ],
            out_specs=pl.BlockSpec((1, tile_n), lambda i: (0, i)),
        ),
        compiler_params=pltpu.CompilerParams(**cp_kwargs),
    )(t_inv, pts_t, xg, yg, zg, v2d)
    return out[0, :k]


def reference_forward(x, sdf_grid, x_grid, y_grid, z_grid, pose):
    """Pure NumPy mirror of SDFInterp.forward (for verification)."""
    pts = np.asarray(x, np.float32).reshape(-1, 3)
    t_inv = np.linalg.inv(np.asarray(pose, np.float32))
    pts_o = pts @ t_inv[:3, :3].T + t_inv[:3, 3]
    grids = [np.asarray(g, np.float32) for g in (x_grid, y_grid, z_grid)]
    vals = np.asarray(sdf_grid, np.float32)
    k = pts_o.shape[0]
    idxs, dists, overalls = [], [], []
    for d in range(3):
        p = grids[d]
        xq = pts_o[:, d]
        ir = np.searchsorted(p, xq, side="left")
        ir = np.where(ir >= p.shape[0], p.shape[0] - 1, ir)
        il = np.clip(ir - 1, 0, p.shape[0] - 1)
        dl = xq - p[il]
        dr = p[ir] - xq
        dl = dl * (dl >= 0)
        dr = dr * (dr >= 0)
        bz = (dl == 0) & (dr == 0)
        dl = np.where(bz, 1.0, dl).astype(np.float32)
        dr = np.where(bz, 1.0, dr).astype(np.float32)
        idxs.append((il, ir))
        dists.append((dl, dr))
        overalls.append(dl + dr)
    num = np.zeros(k, np.float32)
    for onoff in product((0, 1), repeat=3):
        a = [idxs[d][onoff[d]] for d in range(3)]
        w = np.prod(np.stack([dists[d][1 - onoff[d]] for d in range(3)]), axis=0)
        num += vals[a[0], a[1], a[2]] * w
    den = np.prod(np.stack(overalls), axis=0)
    return num / den


if __name__ == "__main__":
    key = jax.random.PRNGKey(0)
    k_pts, k_grid = jax.random.split(key)

    n_rays, n_samples = 16, 64      # 1024 points -> 2 grid steps (both TCs on v7x)
    G = 8                           # SDF grid is G x G x G

    # Synthetic uniform SDF grid (what sdf_util.get_grid_pts gives for an
    # axis-aligned sdf_transform): linspace per axis + random grid values.
    x_grid = jnp.linspace(-1.0, 1.0, G, dtype=jnp.float32)
    y_grid = jnp.linspace(-1.0, 1.0, G, dtype=jnp.float32)
    z_grid = jnp.linspace(-1.0, 1.0, G, dtype=jnp.float32)
    sdf_grid = jax.random.normal(k_grid, (G, G, G), dtype=jnp.float32)

    # Deterministic non-identity object pose (as set via update_pose_and_scale).
    theta = 0.3
    c, s = np.cos(theta), np.sin(theta)
    pose_np = np.array(
        [[c, -s, 0.0, 0.05],
         [s,  c, 0.0, -0.02],
         [0.0, 0.0, 1.0, 0.10],
         [0.0, 0.0, 0.0, 1.0]], dtype=np.float32)
    sdf_map_pose = jnp.asarray(pose_np)

    # Sample points (some fall outside the grid to exercise clamping).
    x = jax.random.uniform(
        k_pts, (n_rays, n_samples, 3), dtype=jnp.float32, minval=-1.2, maxval=1.2)

    out = sdf_interp_forward(x, sdf_grid, x_grid, y_grid, z_grid, sdf_map_pose)
    out = jax.block_until_ready(out)

    ref = reference_forward(
        np.asarray(x), np.asarray(sdf_grid),
        np.asarray(x_grid), np.asarray(y_grid), np.asarray(z_grid), pose_np)
    np.testing.assert_allclose(np.asarray(out), ref, rtol=1e-4, atol=1e-4)

    print("KERNEL_OK")
</pallas_src>

<mosaic_0001>
module attributes {stable_mosaic.version = 11 : i64} {
  func.func @sdf_interp_kernel(%arg0: i32, %arg1: memref<3x4xf32, #tpu.memory_space<smem>>, %arg2: memref<3x512xf32, #tpu.memory_space<vmem>>, %arg3: memref<8x1xf32, #tpu.memory_space<vmem>>, %arg4: memref<8x1xf32, #tpu.memory_space<vmem>>, %arg5: memref<8x1xf32, #tpu.memory_space<vmem>>, %arg6: memref<8x64xf32, #tpu.memory_space<vmem>>, %arg7: memref<1x512xf32, #tpu.memory_space<vmem>>) attributes {dimension_semantics = [#tpu.dimension_semantics<parallel>], iteration_bounds = array<i64: 2>, scalar_prefetch = 0 : i64, scratch_operands = 0 : i64, tpu.core_type = #tpu.core_type<tc>, window_params = [{transform_indices = @transform_0, window_bounds = array<i64: 3, 4>}, {transform_indices = @transform_1, window_bounds = array<i64: 3, 512>}, {pipeline_mode = #tpu.pipeline_mode<synchronous>, transform_indices = @transform_2, window_bounds = array<i64: 8, 1>}, {pipeline_mode = #tpu.pipeline_mode<synchronous>, transform_indices = @transform_3, window_bounds = array<i64: 8, 1>}, {pipeline_mode = #tpu.pipeline_mode<synchronous>, transform_indices = @transform_4, window_bounds = array<i64: 8, 1>}, {pipeline_mode = #tpu.pipeline_mode<synchronous>, transform_indices = @transform_5, window_bounds = array<i64: 8, 64>}, {transform_indices = @transform_6, window_bounds = array<i64: 1, 512>}]} {
    %c0 = arith.constant 0 : index
    %c0_0 = arith.constant 0 : index
    %0 = vector.load %arg2[%c0, %c0_0] : memref<3x512xf32, #tpu.memory_space<vmem>>, vector<3x512xf32>
    %1 = vector.extract_strided_slice %0 {offsets = [0, 0], sizes = [1, 512], strides = [1, 1]} : vector<3x512xf32> to vector<1x512xf32>
    %2 = vector.extract_strided_slice %0 {offsets = [1, 0], sizes = [1, 512], strides = [1, 1]} : vector<3x512xf32> to vector<1x512xf32>
    %3 = vector.extract_strided_slice %0 {offsets = [2, 0], sizes = [1, 512], strides = [1, 1]} : vector<3x512xf32> to vector<1x512xf32>
    %c0_1 = arith.constant 0 : index
    %c0_2 = arith.constant 0 : index
    %4 = memref.load %arg1[%c0_1, %c0_2] : memref<3x4xf32, #tpu.memory_space<smem>>
    %5 = vector.broadcast %4 : f32 to vector<1x512xf32>
    %6 = arith.mulf %5, %1 : vector<1x512xf32>
    %c0_3 = arith.constant 0 : index
    %c1 = arith.constant 1 : index
    %7 = memref.load %arg1[%c0_3, %c1] : memref<3x4xf32, #tpu.memory_space<smem>>
    %8 = vector.broadcast %7 : f32 to vector<1x512xf32>
    %9 = arith.mulf %8, %2 : vector<1x512xf32>
    %10 = arith.addf %6, %9 : vector<1x512xf32>
    %c0_4 = arith.constant 0 : index
    %c2 = arith.constant 2 : index
    %11 = memref.load %arg1[%c0_4, %c2] : memref<3x4xf32, #tpu.memory_space<smem>>
    %12 = vector.broadcast %11 : f32 to vector<1x512xf32>
    %13 = arith.mulf %12, %3 : vector<1x512xf32>
    %14 = arith.addf %10, %13 : vector<1x512xf32>
    %c0_5 = arith.constant 0 : index
    %c3 = arith.constant 3 : index
    %15 = memref.load %arg1[%c0_5, %c3] : memref<3x4xf32, #tpu.memory_space<smem>>
    %16 = vector.broadcast %15 : f32 to vector<1x512xf32>
    %17 = arith.addf %14, %16 : vector<1x512xf32>
    %c1_6 = arith.constant 1 : index
    %c0_7 = arith.constant 0 : index
    %18 = memref.load %arg1[%c1_6, %c0_7] : memref<3x4xf32, #tpu.memory_space<smem>>
    %19 = vector.broadcast %18 : f32 to vector<1x512xf32>
    %20 = arith.mulf %19, %1 : vector<1x512xf32>
    %c1_8 = arith.constant 1 : index
    %c1_9 = arith.constant 1 : index
    %21 = memref.load %arg1[%c1_8, %c1_9] : memref<3x4xf32, #tpu.memory_space<smem>>
    %22 = vector.broadcast %21 : f32 to vector<1x512xf32>
    %23 = arith.mulf %22, %2 : vector<1x512xf32>
    %24 = arith.addf %20, %23 : vector<1x512xf32>
    %c1_10 = arith.constant 1 : index
    %c2_11 = arith.constant 2 : index
    %25 = memref.load %arg1[%c1_10, %c2_11] : memref<3x4xf32, #tpu.memory_space<smem>>
    %26 = vector.broadcast %25 : f32 to vector<1x512xf32>
    %27 = arith.mulf %26, %3 : vector<1x512xf32>
    %28 = arith.addf %24, %27 : vector<1x512xf32>
    %c1_12 = arith.constant 1 : index
    %c3_13 = arith.constant 3 : index
    %29 = memref.load %arg1[%c1_12, %c3_13] : memref<3x4xf32, #tpu.memory_space<smem>>
    %30 = vector.broadcast %29 : f32 to vector<1x512xf32>
    %31 = arith.addf %28, %30 : vector<1x512xf32>
    %c2_14 = arith.constant 2 : index
    %c0_15 = arith.constant 0 : index
    %32 = memref.load %arg1[%c2_14, %c0_15] : memref<3x4xf32, #tpu.memory_space<smem>>
    %33 = vector.broadcast %32 : f32 to vector<1x512xf32>
    %34 = arith.mulf %33, %1 : vector<1x512xf32>
    %c2_16 = arith.constant 2 : index
    %c1_17 = arith.constant 1 : index
    %35 = memref.load %arg1[%c2_16, %c1_17] : memref<3x4xf32, #tpu.memory_space<smem>>
    %36 = vector.broadcast %35 : f32 to vector<1x512xf32>
    %37 = arith.mulf %36, %2 : vector<1x512xf32>
    %38 = arith.addf %34, %37 : vector<1x512xf32>
    %c2_18 = arith.constant 2 : index
    %c2_19 = arith.constant 2 : index
    %39 = memref.load %arg1[%c2_18, %c2_19] : memref<3x4xf32, #tpu.memory_space<smem>>
    %40 = vector.broadcast %39 : f32 to vector<1x512xf32>
    %41 = arith.mulf %40, %3 : vector<1x512xf32>
    %42 = arith.addf %38, %41 : vector<1x512xf32>
    %c2_20 = arith.constant 2 : index
    %c3_21 = arith.constant 3 : index
    %43 = memref.load %arg1[%c2_20, %c3_21] : memref<3x4xf32, #tpu.memory_space<smem>>
    %44 = vector.broadcast %43 : f32 to vector<1x512xf32>
    %45 = arith.addf %42, %44 : vector<1x512xf32>
    %c0_22 = arith.constant 0 : index
    %c0_23 = arith.constant 0 : index
    %46 = vector.load %arg3[%c0_22, %c0_23] : memref<8x1xf32, #tpu.memory_space<vmem>>, vector<8x1xf32>
    %47 = vector.broadcast %46 : vector<8x1xf32> to vector<8x512xf32>
    %48 = vector.broadcast %17 : vector<1x512xf32> to vector<8x512xf32>
    %49 = arith.cmpf olt, %47, %48 : vector<8x512xf32>
    %50 = arith.extui %49 : vector<8x512xi1> to vector<8x512xi32>
    %cst = arith.constant dense<0> : vector<512xi32>
    %51 = vector.multi_reduction <add>, %50, %cst [0] : vector<8x512xi32> to vector<512xi32>
    %52 = vector.shape_cast %51 : vector<512xi32> to vector<1x512xi32>
    %c7_i32 = arith.constant 7 : i32
    %53 = vector.broadcast %c7_i32 : i32 to vector<1x512xi32>
    %54 = arith.minsi %52, %53 : vector<1x512xi32>
    %c1_i32 = arith.constant 1 : i32
    %55 = vector.broadcast %c1_i32 : i32 to vector<1x512xi32>
    %56 = arith.subi %54, %55 : vector<1x512xi32>
    %c0_i32 = arith.constant 0 : i32
    %c7_i32_24 = arith.constant 7 : i32
    %57 = vector.broadcast %c0_i32 : i32 to vector<1x512xi32>
    %58 = arith.maxsi %57, %56 : vector<1x512xi32>
    %59 = vector.broadcast %c7_i32_24 : i32 to vector<1x512xi32>
    %60 = arith.minsi %59, %58 : vector<1x512xi32>
    %61 = tpu.iota {dimensions = array<i32: 0>} : vector<8x512xi32>
    %62 = vector.broadcast %60 : vector<1x512xi32> to vector<8x512xi32>
    %63 = arith.cmpi eq, %61, %62 : vector<8x512xi32>
    %64 = vector.broadcast %54 : vector<1x512xi32> to vector<8x512xi32>
    %65 = arith.cmpi eq, %61, %64 : vector<8x512xi32>
    %cst_25 = arith.constant 0.000000e+00 : f32
    %66 = vector.shape_cast %46 : vector<8x1xf32> to vector<8x1xf32>
    %67 = vector.broadcast %66 : vector<8x1xf32> to vector<8x512xf32>
    %68 = vector.broadcast %cst_25 : f32 to vector<8x512xf32>
    %69 = arith.select %63, %67, %68 : vector<8x512xi1>, vector<8x512xf32>
    %cst_26 = arith.constant dense<0.000000e+00> : vector<512xf32>
    %70 = vector.multi_reduction <add>, %69, %cst_26 [0] : vector<8x512xf32> to vector<512xf32>
    %71 = vector.shape_cast %70 : vector<512xf32> to vector<1x512xf32>
    %cst_27 = arith.constant 0.000000e+00 : f32
    %72 = vector.shape_cast %46 : vector<8x1xf32> to vector<8x1xf32>
    %73 = vector.broadcast %72 : vector<8x1xf32> to vector<8x512xf32>
    %74 = vector.broadcast %cst_27 : f32 to vector<8x512xf32>
    %75 = arith.select %65, %73, %74 : vector<8x512xi1>, vector<8x512xf32>
    %cst_28 = arith.constant dense<0.000000e+00> : vector<512xf32>
    %76 = vector.multi_reduction <add>, %75, %cst_28 [0] : vector<8x512xf32> to vector<512xf32>
    %77 = vector.shape_cast %76 : vector<512xf32> to vector<1x512xf32>
    %78 = arith.subf %17, %71 : vector<1x512xf32>
    %cst_29 = arith.constant 0.000000e+00 : f32
    %79 = vector.broadcast %cst_29 : f32 to vector<1x512xf32>
    %80 = arith.maximumf %78, %79 : vector<1x512xf32>
    %81 = arith.subf %77, %17 : vector<1x512xf32>
    %cst_30 = arith.constant 0.000000e+00 : f32
    %82 = vector.broadcast %cst_30 : f32 to vector<1x512xf32>
    %83 = arith.maximumf %81, %82 : vector<1x512xf32>
    %cst_31 = arith.constant 0.000000e+00 : f32
    %84 = vector.broadcast %cst_31 : f32 to vector<1x512xf32>
    %85 = arith.cmpf oeq, %80, %84 : vector<1x512xf32>
    %cst_32 = arith.constant 0.000000e+00 : f32
    %86 = vector.broadcast %cst_32 : f32 to vector<1x512xf32>
    %87 = arith.cmpf oeq, %83, %86 : vector<1x512xf32>
    %88 = arith.andi %85, %87 : vector<1x512xi1>
    %cst_33 = arith.constant 1.000000e+00 : f32
    %89 = vector.broadcast %cst_33 : f32 to vector<1x512xf32>
    %90 = arith.select %88, %89, %80 : vector<1x512xi1>, vector<1x512xf32>
    %cst_34 = arith.constant 1.000000e+00 : f32
    %91 = vector.broadcast %cst_34 : f32 to vector<1x512xf32>
    %92 = arith.select %88, %91, %83 : vector<1x512xi1>, vector<1x512xf32>
    %cst_35 = arith.constant 0.000000e+00 : f32
    %93 = vector.shape_cast %92 : vector<1x512xf32> to vector<1x512xf32>
    %94 = vector.broadcast %93 : vector<1x512xf32> to vector<8x512xf32>
    %95 = vector.broadcast %cst_35 : f32 to vector<8x512xf32>
    %96 = arith.select %63, %94, %95 : vector<8x512xi1>, vector<8x512xf32>
    %cst_36 = arith.constant 0.000000e+00 : f32
    %97 = vector.shape_cast %90 : vector<1x512xf32> to vector<1x512xf32>
    %98 = vector.broadcast %97 : vector<1x512xf32> to vector<8x512xf32>
    %99 = vector.broadcast %cst_36 : f32 to vector<8x512xf32>
    %100 = arith.select %65, %98, %99 : vector<8x512xi1>, vector<8x512xf32>
    %101 = arith.addf %96, %100 : vector<8x512xf32>
    %102 = arith.addf %90, %92 : vector<1x512xf32>
    %c0_37 = arith.constant 0 : index
    %c0_38 = arith.constant 0 : index
    %103 = vector.load %arg4[%c0_37, %c0_38] : memref<8x1xf32, #tpu.memory_space<vmem>>, vector<8x1xf32>
    %104 = vector.broadcast %103 : vector<8x1xf32> to vector<8x512xf32>
    %105 = vector.broadcast %31 : vector<1x512xf32> to vector<8x512xf32>
    %106 = arith.cmpf olt, %104, %105 : vector<8x512xf32>
    %107 = arith.extui %106 : vector<8x512xi1> to vector<8x512xi32>
    %cst_39 = arith.constant dense<0> : vector<512xi32>
    %108 = vector.multi_reduction <add>, %107, %cst_39 [0] : vector<8x512xi32> to vector<512xi32>
    %109 = vector.shape_cast %108 : vector<512xi32> to vector<1x512xi32>
    %c7_i32_40 = arith.constant 7 : i32
    %110 = vector.broadcast %c7_i32_40 : i32 to vector<1x512xi32>
    %111 = arith.minsi %109, %110 : vector<1x512xi32>
    %c1_i32_41 = arith.constant 1 : i32
    %112 = vector.broadcast %c1_i32_41 : i32 to vector<1x512xi32>
    %113 = arith.subi %111, %112 : vector<1x512xi32>
    %c0_i32_42 = arith.constant 0 : i32
    %c7_i32_43 = arith.constant 7 : i32
    %114 = vector.broadcast %c0_i32_42 : i32 to vector<1x512xi32>
    %115 = arith.maxsi %114, %113 : vector<1x512xi32>
    %116 = vector.broadcast %c7_i32_43 : i32 to vector<1x512xi32>
    %117 = arith.minsi %116, %115 : vector<1x512xi32>
    %118 = tpu.iota {dimensions = array<i32: 0>} : vector<8x512xi32>
    %119 = vector.broadcast %117 : vector<1x512xi32> to vector<8x512xi32>
    %120 = arith.cmpi eq, %118, %119 : vector<8x512xi32>
    %121 = vector.broadcast %111 : vector<1x512xi32> to vector<8x512xi32>
    %122 = arith.cmpi eq, %118, %121 : vector<8x512xi32>
    %cst_44 = arith.constant 0.000000e+00 : f32
    %123 = vector.shape_cast %103 : vector<8x1xf32> to vector<8x1xf32>
    %124 = vector.broadcast %123 : vector<8x1xf32> to vector<8x512xf32>
    %125 = vector.broadcast %cst_44 : f32 to vector<8x512xf32>
    %126 = arith.select %120, %124, %125 : vector<8x512xi1>, vector<8x512xf32>
    %cst_45 = arith.constant dense<0.000000e+00> : vector<512xf32>
    %127 = vector.multi_reduction <add>, %126, %cst_45 [0] : vector<8x512xf32> to vector<512xf32>
    %128 = vector.shape_cast %127 : vector<512xf32> to vector<1x512xf32>
    %cst_46 = arith.constant 0.000000e+00 : f32
    %129 = vector.shape_cast %103 : vector<8x1xf32> to vector<8x1xf32>
    %130 = vector.broadcast %129 : vector<8x1xf32> to vector<8x512xf32>
    %131 = vector.broadcast %cst_46 : f32 to vector<8x512xf32>
    %132 = arith.select %122, %130, %131 : vector<8x512xi1>, vector<8x512xf32>
    %cst_47 = arith.constant dense<0.000000e+00> : vector<512xf32>
    %133 = vector.multi_reduction <add>, %132, %cst_47 [0] : vector<8x512xf32> to vector<512xf32>
    %134 = vector.shape_cast %133 : vector<512xf32> to vector<1x512xf32>
    %135 = arith.subf %31, %128 : vector<1x512xf32>
    %cst_48 = arith.constant 0.000000e+00 : f32
    %136 = vector.broadcast %cst_48 : f32 to vector<1x512xf32>
    %137 = arith.maximumf %135, %136 : vector<1x512xf32>
    %138 = arith.subf %134, %31 : vector<1x512xf32>
    %cst_49 = arith.constant 0.000000e+00 : f32
    %139 = vector.broadcast %cst_49 : f32 to vector<1x512xf32>
    %140 = arith.maximumf %138, %139 : vector<1x512xf32>
    %cst_50 = arith.constant 0.000000e+00 : f32
    %141 = vector.broadcast %cst_50 : f32 to vector<1x512xf32>
    %142 = arith.cmpf oeq, %137, %141 : vector<1x512xf32>
    %cst_51 = arith.constant 0.000000e+00 : f32
    %143 = vector.broadcast %cst_51 : f32 to vector<1x512xf32>
    %144 = arith.cmpf oeq, %140, %143 : vector<1x512xf32>
    %145 = arith.andi %142, %144 : vector<1x512xi1>
    %cst_52 = arith.constant 1.000000e+00 : f32
    %146 = vector.broadcast %cst_52 : f32 to vector<1x512xf32>
    %147 = arith.select %145, %146, %137 : vector<1x512xi1>, vector<1x512xf32>
    %cst_53 = arith.constant 1.000000e+00 : f32
    %148 = vector.broadcast %cst_53 : f32 to vector<1x512xf32>
    %149 = arith.select %145, %148, %140 : vector<1x512xi1>, vector<1x512xf32>
    %cst_54 = arith.constant 0.000000e+00 : f32
    %150 = vector.shape_cast %149 : vector<1x512xf32> to vector<1x512xf32>
    %151 = vector.broadcast %150 : vector<1x512xf32> to vector<8x512xf32>
    %152 = vector.broadcast %cst_54 : f32 to vector<8x512xf32>
    %153 = arith.select %120, %151, %152 : vector<8x512xi1>, vector<8x512xf32>
    %cst_55 = arith.constant 0.000000e+00 : f32
    %154 = vector.shape_cast %147 : vector<1x512xf32> to vector<1x512xf32>
    %155 = vector.broadcast %154 : vector<1x512xf32> to vector<8x512xf32>
    %156 = vector.broadcast %cst_55 : f32 to vector<8x512xf32>
    %157 = arith.select %122, %155, %156 : vector<8x512xi1>, vector<8x512xf32>
    %158 = arith.addf %153, %157 : vector<8x512xf32>
    %159 = arith.addf %147, %149 : vector<1x512xf32>
    %c0_56 = arith.constant 0 : index
    %c0_57 = arith.constant 0 : index
    %160 = vector.load %arg5[%c0_56, %c0_57] : memref<8x1xf32, #tpu.memory_space<vmem>>, vector<8x1xf32>
    %161 = vector.broadcast %160 : vector<8x1xf32> to vector<8x512xf32>
    %162 = vector.broadcast %45 : vector<1x512xf32> to vector<8x512xf32>
    %163 = arith.cmpf olt, %161, %162 : vector<8x512xf32>
    %164 = arith.extui %163 : vector<8x512xi1> to vector<8x512xi32>
    %cst_58 = arith.constant dense<0> : vector<512xi32>
    %165 = vector.multi_reduction <add>, %164, %cst_58 [0] : vector<8x512xi32> to vector<512xi32>
    %166 = vector.shape_cast %165 : vector<512xi32> to vector<1x512xi32>
    %c7_i32_59 = arith.constant 7 : i32
    %167 = vector.broadcast %c7_i32_59 : i32 to vector<1x512xi32>
    %168 = arith.minsi %166, %167 : vector<1x512xi32>
    %c1_i32_60 = arith.constant 1 : i32
    %169 = vector.broadcast %c1_i32_60 : i32 to vector<1x512xi32>
    %170 = arith.subi %168, %169 : vector<1x512xi32>
    %c0_i32_61 = arith.constant 0 : i32
    %c7_i32_62 = arith.constant 7 : i32
    %171 = vector.broadcast %c0_i32_61 : i32 to vector<1x512xi32>
    %172 = arith.maxsi %171, %170 : vector<1x512xi32>
    %173 = vector.broadcast %c7_i32_62 : i32 to vector<1x512xi32>
    %174 = arith.minsi %173, %172 : vector<1x512xi32>
    %175 = tpu.iota {dimensions = array<i32: 0>} : vector<8x512xi32>
    %176 = vector.broadcast %174 : vector<1x512xi32> to vector<8x512xi32>
    %177 = arith.cmpi eq, %175, %176 : vector<8x512xi32>
    %178 = vector.broadcast %168 : vector<1x512xi32> to vector<8x512xi32>
    %179 = arith.cmpi eq, %175, %178 : vector<8x512xi32>
    %cst_63 = arith.constant 0.000000e+00 : f32
    %180 = vector.shape_cast %160 : vector<8x1xf32> to vector<8x1xf32>
    %181 = vector.broadcast %180 : vector<8x1xf32> to vector<8x512xf32>
    %182 = vector.broadcast %cst_63 : f32 to vector<8x512xf32>
    %183 = arith.select %177, %181, %182 : vector<8x512xi1>, vector<8x512xf32>
    %cst_64 = arith.constant dense<0.000000e+00> : vector<512xf32>
    %184 = vector.multi_reduction <add>, %183, %cst_64 [0] : vector<8x512xf32> to vector<512xf32>
    %185 = vector.shape_cast %184 : vector<512xf32> to vector<1x512xf32>
    %cst_65 = arith.constant 0.000000e+00 : f32
    %186 = vector.shape_cast %160 : vector<8x1xf32> to vector<8x1xf32>
    %187 = vector.broadcast %186 : vector<8x1xf32> to vector<8x512xf32>
    %188 = vector.broadcast %cst_65 : f32 to vector<8x512xf32>
    %189 = arith.select %179, %187, %188 : vector<8x512xi1>, vector<8x512xf32>
    %cst_66 = arith.constant dense<0.000000e+00> : vector<512xf32>
    %190 = vector.multi_reduction <add>, %189, %cst_66 [0] : vector<8x512xf32> to vector<512xf32>
    %191 = vector.shape_cast %190 : vector<512xf32> to vector<1x512xf32>
    %192 = arith.subf %45, %185 : vector<1x512xf32>
    %cst_67 = arith.constant 0.000000e+00 : f32
    %193 = vector.broadcast %cst_67 : f32 to vector<1x512xf32>
    %194 = arith.maximumf %192, %193 : vector<1x512xf32>
    %195 = arith.subf %191, %45 : vector<1x512xf32>
    %cst_68 = arith.constant 0.000000e+00 : f32
    %196 = vector.broadcast %cst_68 : f32 to vector<1x512xf32>
    %197 = arith.maximumf %195, %196 : vector<1x512xf32>
    %cst_69 = arith.constant 0.000000e+00 : f32
    %198 = vector.broadcast %cst_69 : f32 to vector<1x512xf32>
    %199 = arith.cmpf oeq, %194, %198 : vector<1x512xf32>
    %cst_70 = arith.constant 0.000000e+00 : f32
    %200 = vector.broadcast %cst_70 : f32 to vector<1x512xf32>
    %201 = arith.cmpf oeq, %197, %200 : vector<1x512xf32>
    %202 = arith.andi %199, %201 : vector<1x512xi1>
    %cst_71 = arith.constant 1.000000e+00 : f32
    %203 = vector.broadcast %cst_71 : f32 to vector<1x512xf32>
    %204 = arith.select %202, %203, %194 : vector<1x512xi1>, vector<1x512xf32>
    %cst_72 = arith.constant 1.000000e+00 : f32
    %205 = vector.broadcast %cst_72 : f32 to vector<1x512xf32>
    %206 = arith.select %202, %205, %197 : vector<1x512xi1>, vector<1x512xf32>
    %cst_73 = arith.constant 0.000000e+00 : f32
    %207 = vector.shape_cast %206 : vector<1x512xf32> to vector<1x512xf32>
    %208 = vector.broadcast %207 : vector<1x512xf32> to vector<8x512xf32>
    %209 = vector.broadcast %cst_73 : f32 to vector<8x512xf32>
    %210 = arith.select %177, %208, %209 : vector<8x512xi1>, vector<8x512xf32>
    %cst_74 = arith.constant 0.000000e+00 : f32
    %211 = vector.shape_cast %204 : vector<1x512xf32> to vector<1x512xf32>
    %212 = vector.broadcast %211 : vector<1x512xf32> to vector<8x512xf32>
    %213 = vector.broadcast %cst_74 : f32 to vector<8x512xf32>
    %214 = arith.select %179, %212, %213 : vector<8x512xi1>, vector<8x512xf32>
    %215 = arith.addf %210, %214 : vector<8x512xf32>
    %216 = arith.addf %204, %206 : vector<1x512xf32>
    %217 = vector.shape_cast %158 : vector<8x512xf32> to vector<8x1x512xf32>
    %218 = vector.shape_cast %215 : vector<8x512xf32> to vector<1x8x512xf32>
    %219 = vector.broadcast %217 : vector<8x1x512xf32> to vector<8x8x512xf32>
    %220 = vector.broadcast %218 : vector<1x8x512xf32> to vector<8x8x512xf32>
    %221 = arith.mulf %219, %220 : vector<8x8x512xf32>
    %222 = vector.shape_cast %221 : vector<8x8x512xf32> to vector<64x512xf32>
    %c0_75 = arith.constant 0 : index
    %c0_76 = arith.constant 0 : index
    %223 = vector.load %arg6[%c0_75, %c0_76] : memref<8x64xf32, #tpu.memory_space<vmem>>, vector<8x64xf32>
    %cst_77 = arith.constant dense<0.000000e+00> : vector<8x512xf32>
    %224 = tpu.matmul %223, %222, %cst_77 {dimension_numbers = #tpu.dot_dimension_numbers<[1], [0], [0], [1], [0, 0, 1, 1], [], []>} : vector<8x64xf32>, vector<64x512xf32>, vector<8x512xf32> -> vector<8x512xf32>
    %225 = arith.mulf %224, %101 : vector<8x512xf32>
    %cst_78 = arith.constant dense<0.000000e+00> : vector<512xf32>
    %226 = vector.multi_reduction <add>, %225, %cst_78 [0] : vector<8x512xf32> to vector<512xf32>
    %227 = vector.shape_cast %226 : vector<512xf32> to vector<1x512xf32>
    %228 = arith.mulf %102, %159 : vector<1x512xf32>
    %229 = arith.mulf %228, %216 : vector<1x512xf32>
    %230 = tpu.reciprocal %229 : vector<1x512xf32> -> vector<1x512xf32>
    %231 = arith.mulf %227, %230 : vector<1x512xf32>
    %c0_79 = arith.constant 0 : index
    %c0_80 = arith.constant 0 : index
    %232 = vector.load %arg7[%c0_79, %c0_80] : memref<1x512xf32, #tpu.memory_space<vmem>>, vector<1x512xf32>
    tpu.vector_store %arg7[%c0_79, %c0_80], %231 {strides = array<i32>} : memref<1x512xf32, #tpu.memory_space<vmem>>, vector<1x512xf32>,
    return
  }
  func.func @transform_0(%arg0: i32) -> (i32, i32) {
    %c0_i32 = arith.constant 0 : i32
    %c0_i32_0 = arith.constant 0 : i32
    %c0_i32_1 = arith.constant 0 : i32
    return %c0_i32, %c0_i32_0 : i32, i32
  }
  func.func @transform_1(%arg0: i32) -> (i32, i32) {
    %c0_i32 = arith.constant 0 : i32
    %c0_i32_0 = arith.constant 0 : i32
    return %c0_i32, %arg0 : i32, i32
  }
  func.func @transform_2(%arg0: i32) -> (i32, i32) {
    %c0_i32 = arith.constant 0 : i32
    %c0_i32_0 = arith.constant 0 : i32
    %c0_i32_1 = arith.constant 0 : i32
    return %c0_i32, %c0_i32_0 : i32, i32
  }
  func.func @transform_3(%arg0: i32) -> (i32, i32) {
    %c0_i32 = arith.constant 0 : i32
    %c0_i32_0 = arith.constant 0 : i32
    %c0_i32_1 = arith.constant 0 : i32
    return %c0_i32, %c0_i32_0 : i32, i32
  }
  func.func @transform_4(%arg0: i32) -> (i32, i32) {
    %c0_i32 = arith.constant 0 : i32
    %c0_i32_0 = arith.constant 0 : i32
    %c0_i32_1 = arith.constant 0 : i32
    return %c0_i32, %c0_i32_0 : i32, i32
  }
  func.func @transform_5(%arg0: i32) -> (i32, i32) {
    %c0_i32 = arith.constant 0 : i32
    %c0_i32_0 = arith.constant 0 : i32
    %c0_i32_1 = arith.constant 0 : i32
    return %c0_i32, %c0_i32_0 : i32, i32
  }
  func.func @transform_6(%arg0: i32) -> (i32, i32) {
    %c0_i32 = arith.constant 0 : i32
    %c0_i32_0 = arith.constant 0 : i32
    return %c0_i32, %arg0 : i32, i32
  }
}

</mosaic_0001>

<llo_original>
// kernel: tpu_custom_call.1
$region0: #{tpu_custom_call.1}
  #allocation0 [shape = 'u32[]', space=smem, size = 0x4, offset = 0x4, fixed_abs, tag = 'smem constant byte address 0x4 - core index']
  #allocation1 [shape = 'u32[144,128]{1,0:T(1,128)}', space=vmem, size = 0x12000, scoped, tag = 'internal scratch']
  %s0 = inlined_call_operand.vmem [shape: f32[3,4], index: 0, kind: input, shape index: {}]
  %s1 = inlined_call_operand.hbm [shape: f32[3,1024], index: 1, kind: input, shape index: {}]
  %s2 = inlined_call_operand.vmem [shape: f32[8,1], index: 2, kind: input, shape index: {}]
  %s3 = inlined_call_operand.vmem [shape: f32[8,1], index: 3, kind: input, shape index: {}]
  %s4 = inlined_call_operand.vmem [shape: f32[8,1], index: 4, kind: input, shape index: {}]
  %s5 = inlined_call_operand.vmem [shape: f32[8,64], index: 5, kind: input, shape index: {}]
  %s6 = inlined_call_operand.hbm [shape: f32[1,1024], index: 6, kind: output, shape index: {}]
  %s7 = sld [smem:[#allocation0]]
  $region65: #{tpu_custom_call.1} parent=0
    _
  %s9 = ssub.s32 1, %s7
  %s10 = scalar_select 0, %s9, %s7
  $region1: #{tpu_custom_call.1} parent=0
    #allocation2 [shape = 'u8[2048]{0}', space=smem, size = 0x800, scoped, tag = 'input window, operand 0, single buffered']
    #allocation3 [shape = 's32[2]{0}', space=sflag, size = 0x8, scoped, tag = 'scoped memory for tpu_custom_call.1']
    #allocation4 [shape = 's32[2]{0}', space=sflag, size = 0x8, scoped, tag = 'scoped memory for tpu_custom_call.1']
    #allocation5 [shape = 's32[2]{0}', space=sflag, size = 0x8, scoped, tag = 'scoped memory for tpu_custom_call.1']
    #allocation6 [shape = 'u8[16384]{0}', space=vmem, size = 0x4000, scoped, tag = 'input window, operand 1']
    #allocation7 [shape = 'u8[4096]{0}', space=vmem, size = 0x1000, scoped, tag = 'output window, operand 0']
    %11 = vsyncpa [#allocation5], 0
    %12 = vsyncpa [#allocation3], 0
    %s13 = scalar_lea.sflag [#allocation3], 1
    %14 = vsyncpa %s13, 0
    %15 = vsyncpa [#allocation4], 0
    %s16 = scalar_lea.sflag [#allocation4], 1
    %17 = vsyncpa %s16, 0
    loop: start=0, step=1, limit=4
    $region2: #{tpu_custom_call.1} parent=1 // loop_pre_header
      _
    $region3: #{tpu_custom_call.1} parent=1 // loop_header
      %s19 = sphi 0, %s23
      %p20 = scmp.ge.s32.totalorder %s19, 4
      %s27 = sphi 0, %s27
      %s29 = sphi 0, %s27
      %s30 = sphi 0, %s29
      %s44 = sphi 0, %s30
      %s50 = sphi 0, %s52
      %s53 = sphi 0, %s50
      %s54 = sphi 0, %s53
      %s70 = sphi 0, %s54
      %s74 = sphi 0, %s74
      %s76 = sphi 0, %s74
      %s77 = sphi 0, %s76
      %s91 = sphi 0, %s77
      %s95 = sphi 0, %s95
      %s97 = sphi 0, %s95
      %s98 = sphi 0, %s97
      %s112 = sphi 0, %s98
      %s116 = sphi 0, %s116
      %s118 = sphi 0, %s116
      %s119 = sphi 0, %s118
      %s133 = sphi 0, %s119
      %s137 = sphi 0, %s137
      %s139 = sphi 0, %s137
      %s140 = sphi 0, %s139
      %s154 = sphi 0, %s140
      %s160 = sphi 0, %s162
      %s163 = sphi 0, %s160
      %s164 = sphi 0, %s163
      %s180 = sphi 0, %s164
    $region4: #{tpu_custom_call.1} parent=1 // loop_header_branch
      %22 = sbr.rel (%p20) target = $region8
    $region5: #{tpu_custom_call.1} parent=1 // loop_body
      %s24 = ssub.s32 %s19, 1
      %s25 = ssub.s32 %s19, 2
      %s26 = sadd.s32 %s19, 1
      %s28 = sadd.s32 %s27, 1
      %p31 = scmp.eq.s32.totalorder %s19, 1
      %p32 = scmp.ne.s32.totalorder %s27, %s29
      %p33 = scmp.eq.s32.totalorder %s19, 0
      %p34 = por %p32, %p33
      %p35 = scmp.ne.s32.totalorder %s27, %s29
      %p36 = scmp.eq.s32.totalorder %s24, 1
      %p37 = por %p35, %p36
      %p38 = scmp.ne.s32.totalorder %s29, %s30
      %p39 = scmp.eq.s32.totalorder %s24, 0
      %p40 = por %p38, %p39
      %p41 = scmp.ne.s32.totalorder %s29, %s30
      %p42 = scmp.eq.s32.totalorder %s25, 1
      %p43 = por %p41, %p42
      %p45 = scmp.ne.s32.totalorder %s30, %s44
      %p46 = scmp.eq.s32.totalorder %s25, 0
      %p47 = por %p45, %p46
      %s48 = ssub.s32 %s19, %s26
      %p49 = scmp.eq.s32.totalorder %s48, 0
      %s51 = sadd.s32 %s50, 1
      %s52 = scalar_select %p49, %s50, %s51
      %p55 = pneg %p49
      %p56 = scmp.eq.s32.totalorder %s19, 1
      %p57 = por %p55, %p56
      %p58 = scmp.ne.s32.totalorder %s50, %s53
      %p59 = scmp.eq.s32.totalorder %s19, 0
      %p60 = por %p58, %p59
      %p61 = scmp.ne.s32.totalorder %s50, %s53
      %p62 = scmp.eq.s32.totalorder %s24, 1
      %p63 = por %p61, %p62
      %p64 = scmp.ne.s32.totalorder %s53, %s54
      %p65 = scmp.eq.s32.totalorder %s24, 0
      %p66 = por %p64, %p65
      %p67 = scmp.ne.s32.totalorder %s53, %s54
      %p68 = scmp.eq.s32.totalorder %s25, 1
      %p69 = por %p67, %p68
      %p71 = scmp.ne.s32.totalorder %s54, %s70
      %p72 = scmp.eq.s32.totalorder %s25, 0
      %p73 = por %p71, %p72
      %s75 = sadd.s32 %s74, 1
      %p78 = scmp.eq.s32.totalorder %s19, 1
      %p79 = scmp.ne.s32.totalorder %s74, %s76
      %p80 = scmp.eq.s32.totalorder %s19, 0
      %p81 = por %p79, %p80
      %p82 = scmp.ne.s32.totalorder %s74, %s76
      %p83 = scmp.eq.s32.totalorder %s24, 1
      %p84 = por %p82, %p83
      %p85 = scmp.ne.s32.totalorder %s76, %s77
      %p86 = scmp.eq.s32.totalorder %s24, 0
      %p87 = por %p85, %p86
      %p88 = scmp.ne.s32.totalorder %s76, %s77
      %p89 = scmp.eq.s32.totalorder %s25, 1
      %p90 = por %p88, %p89
      %p92 = scmp.ne.s32.totalorder %s77, %s91
      %p93 = scmp.eq.s32.totalorder %s25, 0
      %p94 = por %p92, %p93
      %s96 = sadd.s32 %s95, 1
      %p99 = scmp.eq.s32.totalorder %s19, 1
      %p100 = scmp.ne.s32.totalorder %s95, %s97
      %p101 = scmp.eq.s32.totalorder %s19, 0
      %p102 = por %p100, %p101
      %p103 = scmp.ne.s32.totalorder %s95, %s97
      %p104 = scmp.eq.s32.totalorder %s24, 1
      %p105 = por %p103, %p104
      %p106 = scmp.ne.s32.totalorder %s97, %s98
      %p107 = scmp.eq.s32.totalorder %s24, 0
      %p108 = por %p106, %p107
      %p109 = scmp.ne.s32.totalorder %s97, %s98
      %p110 = scmp.eq.s32.totalorder %s25, 1
      %p111 = por %p109, %p110
      %p113 = scmp.ne.s32.totalorder %s98, %s112
      %p114 = scmp.eq.s32.totalorder %s25, 0
      %p115 = por %p113, %p114
      %s117 = sadd.s32 %s116, 1
      %p120 = scmp.eq.s32.totalorder %s19, 1
      %p121 = scmp.ne.s32.totalorder %s116, %s118
      %p122 = scmp.eq.s32.totalorder %s19, 0
      %p123 = por %p121, %p122
      %p124 = scmp.ne.s32.totalorder %s116, %s118
      %p125 = scmp.eq.s32.totalorder %s24, 1
      %p126 = por %p124, %p125
      %p127 = scmp.ne.s32.totalorder %s118, %s119
      %p128 = scmp.eq.s32.totalorder %s24, 0
      %p129 = por %p127, %p128
      %p130 = scmp.ne.s32.totalorder %s118, %s119
      %p131 = scmp.eq.s32.totalorder %s25, 1
      %p132 = por %p130, %p131
      %p134 = scmp.ne.s32.totalorder %s119, %s133
      %p135 = scmp.eq.s32.totalorder %s25, 0
      %p136 = por %p134, %p135
      %s138 = sadd.s32 %s137, 1
      %p141 = scmp.eq.s32.totalorder %s19, 1
      %p142 = scmp.ne.s32.totalorder %s137, %s139
      %p143 = scmp.eq.s32.totalorder %s19, 0
      %p144 = por %p142, %p143
      %p145 = scmp.ne.s32.totalorder %s137, %s139
      %p146 = scmp.eq.s32.totalorder %s24, 1
      %p147 = por %p145, %p146
      %p148 = scmp.ne.s32.totalorder %s139, %s140
      %p149 = scmp.eq.s32.totalorder %s24, 0
      %p150 = por %p148, %p149
      %p151 = scmp.ne.s32.totalorder %s139, %s140
      %p152 = scmp.eq.s32.totalorder %s25, 1
      %p153 = por %p151, %p152
      %p155 = scmp.ne.s32.totalorder %s140, %s154
      %p156 = scmp.eq.s32.totalorder %s25, 0
      %p157 = por %p155, %p156
      %s158 = ssub.s32 %s19, %s26
      %p159 = scmp.eq.s32.totalorder %s158, 0
      %s161 = sadd.s32 %s160, 1
      %s162 = scalar_select %p159, %s160, %s161
      %p165 = pneg %p159
      %p166 = scmp.eq.s32.totalorder %s19, 1
      %p167 = por %p165, %p166
      %p168 = scmp.ne.s32.totalorder %s160, %s163
      %p169 = scmp.eq.s32.totalorder %s19, 0
      %p170 = por %p168, %p169
      %p171 = scmp.ne.s32.totalorder %s160, %s163
      %p172 = scmp.eq.s32.totalorder %s24, 1
      %p173 = por %p171, %p172
      %p174 = scmp.ne.s32.totalorder %s163, %s164
      %p175 = scmp.eq.s32.totalorder %s24, 0
      %p176 = por %p174, %p175
      %p177 = scmp.ne.s32.totalorder %s163, %s164
      %p178 = scmp.eq.s32.totalorder %s25, 1
      %p179 = por %p177, %p178
      %p181 = scmp.ne.s32.totalorder %s164, %s180
      %p182 = scmp.eq.s32.totalorder %s25, 0
      %p183 = por %p181, %p182
      %p184 = scmp.le.s32.totalorder 1, %s19
      %p185 = scmp.lt.s32.totalorder %s19, 3
      %p186 = pnand %p184, %p185
      %p187 = pneg %p186
      // Predicated region
      $region9: #{tpu_custom_call.1} parent=5 // pred_check
        _
      $region10: #{tpu_custom_call.1} parent=5 // pred_check_branch
        %189 = sbr.rel (%p186) target = $region12
      $region11: #{tpu_custom_call.1} parent=5 // pred_region
        %s190 = ssub.s32 %s19, 1
        // Predicated region
        $region13: #{tpu_custom_call.1} parent=11 // pred_check
          %p191 = pneg %p40
        $region14: #{tpu_custom_call.1} parent=11 // pred_check_branch
          %193 = sbr.rel (%p191) target = $region16
        $region15: #{tpu_custom_call.1} parent=11 // pred_region
          %s195 = ssub.s32 64, 64
          %196 = vsyncadd [#allocation5], %s195
          %s198 = sshll.u32 %s0, 4
          %s199 = int_to_ptr.vmem [resolvable:$true] %s198
          %201 = dma.vmem_to_smem %s199, 64, [#allocation2], [#allocation5]
        $region16: #{tpu_custom_call.1} parent=11 // pred_fallthru
          _
        // Predicated region
        $region17: #{tpu_custom_call.1} parent=11 // pred_check
          %p202 = pneg %p87
        $region18: #{tpu_custom_call.1} parent=11 // pred_check_branch
          %204 = sbr.rel (%p202) target = $region20
        $region19: #{tpu_custom_call.1} parent=11 // pred_region
          _
        $region20: #{tpu_custom_call.1} parent=11 // pred_fallthru
          _
        // Predicated region
        $region21: #{tpu_custom_call.1} parent=11 // pred_check
          %p205 = pneg %p108
        $region22: #{tpu_custom_call.1} parent=11 // pred_check_branch
          %207 = sbr.rel (%p205) target = $region24
        $region23: #{tpu_custom_call.1} parent=11 // pred_region
          _
        $region24: #{tpu_custom_call.1} parent=11 // pred_fallthru
          _
        // Predicated region
        $region25: #{tpu_custom_call.1} parent=11 // pred_check
          %p208 = pneg %p129
        $region26: #{tpu_custom_call.1} parent=11 // pred_check_branch
          %210 = sbr.rel (%p208) target = $region28
        $region27: #{tpu_custom_call.1} parent=11 // pred_region
          _
        $region28: #{tpu_custom_call.1} parent=11 // pred_fallthru
          _
        // Predicated region
        $region29: #{tpu_custom_call.1} parent=11 // pred_check
          %p211 = pneg %p150
        $region30: #{tpu_custom_call.1} parent=11 // pred_check_branch
          %213 = sbr.rel (%p211) target = $region32
        $region31: #{tpu_custom_call.1} parent=11 // pred_region
          _
        $region32: #{tpu_custom_call.1} parent=11 // pred_fallthru
          _
      $region12: #{tpu_custom_call.1} parent=5 // pred_fallthru
        _
      %p214 = scmp.lt.s32.totalorder %s19, 2
      // Predicated region
      $region33: #{tpu_custom_call.1} parent=5 // pred_check
        %p215 = pneg %p214
      $region34: #{tpu_custom_call.1} parent=5 // pred_check_branch
        %217 = sbr.rel (%p215) target = $region36
      $region35: #{tpu_custom_call.1} parent=5 // pred_region
        // Predicated region
        $region37: #{tpu_custom_call.1} parent=35 // pred_check
          %p218 = pneg %p60
        $region38: #{tpu_custom_call.1} parent=35 // pred_check_branch
          %220 = sbr.rel (%p218) target = $region40
        $region39: #{tpu_custom_call.1} parent=35 // pred_region
          %s221 = sand.u32 %s50, 1
          %s222 = scalar_lea.sflag [#allocation3], %s221
          %s223 = sand.u32 %s50, 1
          %s224 = smul.addr %s223, 16
          %s225 = scalar_lea.vmem [#allocation6], %s224
          %s226 = smul.u32 4, %s19
          %s228 = ssub.s32 256, 256
          %229 = vsyncadd %s222, %s228
          %s230 = smul.addr %s226, 64
          %s231 = scalar_lea.hbm %s1, %s230
          %s233 = sshll.u32 %s225, 4
          %s234 = int_to_ptr.vmem [resolvable:$true] %s233
          %236 = dma.hbm_to_vmem [thread:$0]  %s231, 256, %s234, %s222
        $region40: #{tpu_custom_call.1} parent=35 // pred_fallthru
          _
      $region36: #{tpu_custom_call.1} parent=5 // pred_fallthru
        _
      %p237 = scmp.le.s32.totalorder 1, %s19
      %p238 = scmp.lt.s32.totalorder %s19, 3
      %p239 = pnand %p237, %p238
      %p240 = pneg %p239
      // Predicated region
      $region41: #{tpu_custom_call.1} parent=5 // pred_check
        _
      $region42: #{tpu_custom_call.1} parent=5 // pred_check_branch
        %242 = sbr.rel (%p239) target = $region44
      $region43: #{tpu_custom_call.1} parent=5 // pred_region
        %s243 = ssub.s32 %s19, 1
        // Predicated region
        $region45: #{tpu_custom_call.1} parent=43 // pred_check
          %p244 = pneg %p40
        $region46: #{tpu_custom_call.1} parent=43 // pred_check_branch
          %246 = sbr.rel (%p244) target = $region48
        $region47: #{tpu_custom_call.1} parent=43 // pred_region
          %247 = dma.done [#allocation5], 64
        $region48: #{tpu_custom_call.1} parent=43 // pred_fallthru
          _
        %s248 = sand.u32 %s53, 1
        %s249 = scalar_lea.sflag [#allocation3], %s248
        %s250 = sand.u32 %s53, 1
        %s251 = smul.addr %s250, 16
        %s252 = scalar_lea.vmem [#allocation6], %s251
        // Predicated region
        $region49: #{tpu_custom_call.1} parent=43 // pred_check
          %p253 = pneg %p66
        $region50: #{tpu_custom_call.1} parent=43 // pred_check_branch
          %255 = sbr.rel (%p253) target = $region52
        $region51: #{tpu_custom_call.1} parent=43 // pred_region
          %256 = dma.done %s249, 256
        $region52: #{tpu_custom_call.1} parent=43 // pred_fallthru
          _
        %257 = sfence
        %p258 = pneg %p40
        %p259 = pneg %p37
        %s260 = sand.u32 %s53, 1
        %s261 = scalar_lea.sflag [#allocation3], %s260
        %s262 = sand.u32 %s53, 1
        %s263 = smul.addr %s262, 16
        %s264 = scalar_lea.vmem [#allocation6], %s263
        %p265 = pneg %p66
        %p266 = pneg %p63
        %p267 = pneg %p87
        %p268 = pneg %p84
        %p269 = pneg %p108
        %p270 = pneg %p105
        %p271 = pneg %p129
        %p272 = pneg %p126
        %p273 = pneg %p150
        %p274 = pneg %p147
        %p275 = pneg %p176
        %p276 = pneg %p173
        %s277 = sand.u32 %s163, 1
        %s278 = scalar_lea.sflag [#allocation4], %s277
        %s279 = sand.u32 %s163, 1
        %s280 = smul.addr %s279, 4
        %s281 = scalar_lea.vmem [#allocation7], %s280
        %s282 = smul.u32 4, %s24
        %s283 = smul.u32 4, %s24
        %v284 = vld [vmem:[%s252] sm:$0x77]
        %v285 = vld [vmem:[%s252 + $0x8] sm:$0x77]
        %s286 = sld [smem:[#allocation2]]
        %v287 = vstv %s286
        %v288 = vmul.f32 %v287, %v284
        %v289 = vmul.f32 %v287, %v285
        %s290 = sld [smem:[#allocation2 + $0x1]]
        %v291 = vstv %s290
        %v292 = vmul.f32 %v291, %v284
        %v293 = vmul.f32 %v291, %v285
        %v296 = vrot.slane %v292, 5
        %v297 = vrot.slane %v296, 4
        %v298 = vrot.slane %v293, 5
        %v299 = vrot.slane %v298, 4
        %v302 = vadd.f32 %v288, %v297
        %v303 = vadd.f32 %v289, %v299
        %s304 = sld [smem:[#allocation2 + $0x2]]
        %v305 = vstv %s304
        %v306 = vmul.f32 %v305, %v284
        %v307 = vmul.f32 %v305, %v285
        %v310 = vrot.slane %v306, 6
        %v311 = vrot.slane %v310, 4
        %v312 = vrot.slane %v307, 6
        %v313 = vrot.slane %v312, 4
        %v316 = vadd.f32 %v302, %v311
        %v317 = vadd.f32 %v303, %v313
        %s318 = sld [smem:[#allocation2 + $0x3]]
        %v319 = vstv %s318
        %v320 = vadd.f32 %v316, %v319
        %v321 = vadd.f32 %v317, %v319
        %s322 = sld [smem:[#allocation2 + $0x80]]
        %v323 = vstv %s322
        %v324 = vmul.f32 %v323, %v284
        %v325 = vmul.f32 %v323, %v285
        %s326 = sld [smem:[#allocation2 + $0x81]]
        %v327 = vstv %s326
        %v328 = vmul.f32 %v327, %v284
        %v329 = vmul.f32 %v327, %v285
        %v332 = vrot.slane %v328, 5
        %v333 = vrot.slane %v332, 4
        %v334 = vrot.slane %v329, 5
        %v335 = vrot.slane %v334, 4
        %v338 = vadd.f32 %v324, %v333
        %v339 = vadd.f32 %v325, %v335
        %s340 = sld [smem:[#allocation2 + $0x82]]
        %v341 = vstv %s340
        %v342 = vmul.f32 %v341, %v284
        %v343 = vmul.f32 %v341, %v285
        %v346 = vrot.slane %v342, 6
        %v347 = vrot.slane %v346, 4
        %v348 = vrot.slane %v343, 6
        %v349 = vrot.slane %v348, 4
        %v352 = vadd.f32 %v338, %v347
        %v353 = vadd.f32 %v339, %v349
        %s354 = sld [smem:[#allocation2 + $0x83]]
        %v355 = vstv %s354
        %v356 = vadd.f32 %v352, %v355
        %v357 = vadd.f32 %v353, %v355
        %s358 = sld [smem:[#allocation2 + $0x100]]
        %v359 = vstv %s358
        %v360 = vmul.f32 %v359, %v284
        %v361 = vmul.f32 %v359, %v285
        %s362 = sld [smem:[#allocation2 + $0x101]]
        %v363 = vstv %s362
        %v364 = vmul.f32 %v363, %v284
        %v365 = vmul.f32 %v363, %v285
        %v368 = vrot.slane %v364, 5
        %v369 = vrot.slane %v368, 4
        %v370 = vrot.slane %v365, 5
        %v371 = vrot.slane %v370, 4
        %v374 = vadd.f32 %v360, %v369
        %v375 = vadd.f32 %v361, %v371
        %s376 = sld [smem:[#allocation2 + $0x102]]
        %v377 = vstv %s376
        %v378 = vmul.f32 %v377, %v284
        %v379 = vmul.f32 %v377, %v285
        %v382 = vrot.slane %v378, 6
        %v383 = vrot.slane %v382, 4
        %v384 = vrot.slane %v379, 6
        %v385 = vrot.slane %v384, 4
        %v388 = vadd.f32 %v374, %v383
        %v389 = vadd.f32 %v375, %v385
        %s390 = sld [smem:[#allocation2 + $0x103]]
        %v391 = vstv %s390
        %v392 = vadd.f32 %v388, %v391
        %v393 = vadd.f32 %v389, %v391
        %v394 = vld [vmem:[%s2] sm:$0xff]
        %396 = vset.pattern.permute.xlu0 0
        %397 = vperm.xlu0 %396, %v394
        %v398 = vpop.permute.xlu0 %397
        %v402 = vlaneseq
        %v403 = vshrl.u32 %v402, 7
        %v404 = vsub.s32 0, %v403
        %v405 = vrot.slane %v320, %v404
        %v406 = vlaneseq
        %v407 = vshrl.u32 %v406, 7
        %v408 = vsub.s32 4, %v407
        %v409 = vrot.slane %v320, %v408
        %v410 = vlaneseq
        %v411 = vshrl.u32 %v410, 7
        %v412 = vsub.s32 0, %v411
        %v413 = vrot.slane %v321, %v412
        %v414 = vlaneseq
        %v415 = vshrl.u32 %v414, 7
        %v416 = vsub.s32 4, %v415
        %v417 = vrot.slane %v321, %v416
        %v422 = vlaneseq
        %v423 = vshrl.u32 %v422, 7
        %v424 = vsub.s32 0, %v423
        %v425 = vrot.slane %v405, %v424
        %v426 = vlaneseq
        %v427 = vshrl.u32 %v426, 7
        %v428 = vsub.s32 0, %v427
        %v429 = vrot.slane %v409, %v428
        %v430 = vlaneseq
        %v431 = vshrl.u32 %v430, 7
        %v432 = vsub.s32 0, %v431
        %v433 = vrot.slane %v413, %v432
        %v434 = vlaneseq
        %v435 = vshrl.u32 %v434, 7
        %v436 = vsub.s32 0, %v435
        %v437 = vrot.slane %v417, %v436
        %vm438 = vcmp.lt.f32.partialorder %v398, %v425
        %vm439 = vcmp.lt.f32.partialorder %v398, %v429
        %vm440 = vcmp.lt.f32.partialorder %v398, %v433
        %vm441 = vcmp.lt.f32.partialorder %v398, %v437
        %v442 = vsel %vm438, 1, 0
        %v443 = vsel %vm439, 1, 0
        %v444 = vsel %vm440, 1, 0
        %v445 = vsel %vm441, 1, 0
        %v446 = vrot.slane %v442, 4
        %v447 = vadd.s32 %v442, %v446
        %v448 = vrot.slane %v447, 2
        %v449 = vadd.s32 %v447, %v448
        %v450 = vrot.slane %v449, 1
        %v451 = vadd.s32 %v449, %v450
        %v452 = vrot.slane %v443, 4
        %v453 = vadd.s32 %v443, %v452
        %v454 = vrot.slane %v453, 2
        %v455 = vadd.s32 %v453, %v454
        %v456 = vrot.slane %v455, 1
        %v457 = vadd.s32 %v455, %v456
        %v458 = vrot.slane %v444, 4
        %v459 = vadd.s32 %v444, %v458
        %v460 = vrot.slane %v459, 2
        %v461 = vadd.s32 %v459, %v460
        %v462 = vrot.slane %v461, 1
        %v463 = vadd.s32 %v461, %v462
        %v464 = vrot.slane %v445, 4
        %v465 = vadd.s32 %v445, %v464
        %v466 = vrot.slane %v465, 2
        %v467 = vadd.s32 %v465, %v466
        %v468 = vrot.slane %v467, 1
        %v469 = vadd.s32 %v467, %v468
        %vm470 = vcmp.lt.s32.totalorder %v451, 7
        %v471 = vsel %vm470, %v451, 7
        %vm472 = vcmp.lt.s32.totalorder %v457, 7
        %v473 = vsel %vm472, %v457, 7
        %vm474 = vcmp.lt.s32.totalorder %v463, 7
        %v475 = vsel %vm474, %v463, 7
        %vm476 = vcmp.lt.s32.totalorder %v469, 7
        %v477 = vsel %vm476, %v469, 7
        %v478 = vsub.s32 %v471, 1
        %v479 = vsub.s32 %v473, 1
        %v480 = vsub.s32 %v475, 1
        %v481 = vsub.s32 %v477, 1
        %vm482 = vcmp.gt.s32.totalorder %v478, 0
        %v483 = vsel %vm482, %v478, 0
        %vm484 = vcmp.gt.s32.totalorder %v479, 0
        %v485 = vsel %vm484, %v479, 0
        %vm486 = vcmp.gt.s32.totalorder %v480, 0
        %v487 = vsel %vm486, %v480, 0
        %vm488 = vcmp.gt.s32.totalorder %v481, 0
        %v489 = vsel %vm488, %v481, 0
        %vm490 = vcmp.lt.s32.totalorder %v483, 7
        %v491 = vsel %vm490, %v483, 7
        %vm492 = vcmp.lt.s32.totalorder %v485, 7
        %v493 = vsel %vm492, %v485, 7
        %vm494 = vcmp.lt.s32.totalorder %v487, 7
        %v495 = vsel %vm494, %v487, 7
        %vm496 = vcmp.lt.s32.totalorder %v489, 7
        %v497 = vsel %vm496, %v489, 7
        %v498 = vlaneseq
        %v499 = vshrl.u32 %v498, 7
        %vm500 = vcmp.eq.s32.totalorder %v499, %v491
        %vm501 = vcmp.eq.s32.totalorder %v499, %v493
        %vm502 = vcmp.eq.s32.totalorder %v499, %v495
        %vm503 = vcmp.eq.s32.totalorder %v499, %v497
        %vm504 = vcmp.eq.s32.totalorder %v499, %v471
        %vm505 = vcmp.eq.s32.totalorder %v499, %v473
        %vm506 = vcmp.eq.s32.totalorder %v499, %v475
        %vm507 = vcmp.eq.s32.totalorder %v499, %v477
        %v508 = vsel %vm500, %v398, 0.0
        %v509 = vsel %vm501, %v398, 0.0
        %v510 = vsel %vm502, %v398, 0.0
        %v511 = vsel %vm503, %v398, 0.0
        %v512 = vrot.slane %v508, 4
        %v513 = vadd.f32 %v508, %v512
        %v514 = vrot.slane %v513, 2
        %v515 = vadd.f32 %v513, %v514
        %v516 = vrot.slane %v515, 1
        %v517 = vadd.f32 %v515, %v516
        %v518 = vrot.slane %v509, 4
        %v519 = vadd.f32 %v509, %v518
        %v520 = vrot.slane %v519, 2
        %v521 = vadd.f32 %v519, %v520
        %v522 = vrot.slane %v521, 1
        %v523 = vadd.f32 %v521, %v522
        %v524 = vrot.slane %v510, 4
        %v525 = vadd.f32 %v510, %v524
        %v526 = vrot.slane %v525, 2
        %v527 = vadd.f32 %v525, %v526
        %v528 = vrot.slane %v527, 1
        %v529 = vadd.f32 %v527, %v528
        %v530 = vrot.slane %v511, 4
        %v531 = vadd.f32 %v511, %v530
        %v532 = vrot.slane %v531, 2
        %v533 = vadd.f32 %v531, %v532
        %v534 = vrot.slane %v533, 1
        %v535 = vadd.f32 %v533, %v534
        %v536 = vsel %vm504, %v398, 0.0
        %v537 = vsel %vm505, %v398, 0.0
        %v538 = vsel %vm506, %v398, 0.0
        %v539 = vsel %vm507, %v398, 0.0
        %v540 = vrot.slane %v536, 4
        %v541 = vadd.f32 %v536, %v540
        %v542 = vrot.slane %v541, 2
        %v543 = vadd.f32 %v541, %v542
        %v544 = vrot.slane %v543, 1
        %v545 = vadd.f32 %v543, %v544
        %v546 = vrot.slane %v537, 4
        %v547 = vadd.f32 %v537, %v546
        %v548 = vrot.slane %v547, 2
        %v549 = vadd.f32 %v547, %v548
        %v550 = vrot.slane %v549, 1
        %v551 = vadd.f32 %v549, %v550
        %v552 = vrot.slane %v538, 4
        %v553 = vadd.f32 %v538, %v552
        %v554 = vrot.slane %v553, 2
        %v555 = vadd.f32 %v553, %v554
        %v556 = vrot.slane %v555, 1
        %v557 = vadd.f32 %v555, %v556
        %v558 = vrot.slane %v539, 4
        %v559 = vadd.f32 %v539, %v558
        %v560 = vrot.slane %v559, 2
        %v561 = vadd.f32 %v559, %v560
        %v562 = vrot.slane %v561, 1
        %v563 = vadd.f32 %v561, %v562
        %v568 = vcombine.low %v517, %v523
        %v569 = vcombine.low %v529, %v535
        %v572 = vsub.f32 %v320, %v568
        %v573 = vsub.f32 %v321, %v569
        %v574 = vmax.f32 %v572, 0.0
        %v575 = vmax.f32 %v573, 0.0
        %v576 = vsub.f32 %v545, %v405
        %v577 = vsub.f32 %v551, %v409
        %v578 = vsub.f32 %v557, %v413
        %v579 = vsub.f32 %v563, %v417
        %v580 = vmax.f32 %v576, 0.0
        %v581 = vmax.f32 %v577, 0.0
        %v582 = vmax.f32 %v578, 0.0
        %v583 = vmax.f32 %v579, 0.0
        %vm584 = vcmp.eq.f32.partialorder %v574, 0.0
        %vm585 = vcmp.eq.f32.partialorder %v575, 0.0
        %vm586 = vcmp.eq.f32.partialorder %v580, 0.0
        %vm587 = vcmp.eq.f32.partialorder %v581, 0.0
        %vm588 = vcmp.eq.f32.partialorder %v582, 0.0
        %vm589 = vcmp.eq.f32.partialorder %v583, 0.0
        %v590 = vsel %vm586, 1, 0
        %v591 = vsel %vm587, 1, 0
        %v592 = vsel %vm588, 1, 0
        %v593 = vsel %vm589, 1, 0
        %v594 = vcombine.low %v590, %v591
        %v595 = vcombine.low %v592, %v593
        %vm596 = vcmp.ne.s32.totalorder %v594, 0
        %vm597 = vcmp.ne.s32.totalorder %v595, 0
        %vm598 = vmand %vm584, %vm596
        %vm599 = vmand %vm585, %vm597
        %v600 = vsel %vm598, 1.0, %v574
        %v601 = vsel %vm599, 1.0, %v575
        %v606 = vcombine.low %v580, %v581
        %v607 = vcombine.low %v582, %v583
        %v610 = vsel %vm598, 1.0, %v606
        %v611 = vsel %vm599, 1.0, %v607
        %v614 = vlaneseq
        %v615 = vshrl.u32 %v614, 7
        %v616 = vsub.s32 0, %v615
        %v617 = vrot.slane %v610, %v616
        %v618 = vlaneseq
        %v619 = vshrl.u32 %v618, 7
        %v620 = vsub.s32 4, %v619
        %v621 = vrot.slane %v610, %v620
        %v622 = vlaneseq
        %v623 = vshrl.u32 %v622, 7
        %v624 = vsub.s32 0, %v623
        %v625 = vrot.slane %v611, %v624
        %v626 = vlaneseq
        %v627 = vshrl.u32 %v626, 7
        %v628 = vsub.s32 4, %v627
        %v629 = vrot.slane %v611, %v628
        %v634 = vlaneseq
        %v635 = vshrl.u32 %v634, 7
        %v636 = vsub.s32 0, %v635
        %v637 = vrot.slane %v617, %v636
        %v638 = vlaneseq
        %v639 = vshrl.u32 %v638, 7
        %v640 = vsub.s32 0, %v639
        %v641 = vrot.slane %v621, %v640
        %v642 = vlaneseq
        %v643 = vshrl.u32 %v642, 7
        %v644 = vsub.s32 0, %v643
        %v645 = vrot.slane %v625, %v644
        %v646 = vlaneseq
        %v647 = vshrl.u32 %v646, 7
        %v648 = vsub.s32 0, %v647
        %v649 = vrot.slane %v629, %v648
        %v650 = vsel %vm500, %v637, 0.0
        %v651 = vsel %vm501, %v641, 0.0
        %v652 = vsel %vm502, %v645, 0.0
        %v653 = vsel %vm503, %v649, 0.0
        %v656 = vlaneseq
        %v657 = vshrl.u32 %v656, 7
        %v658 = vsub.s32 0, %v657
        %v659 = vrot.slane %v600, %v658
        %v660 = vlaneseq
        %v661 = vshrl.u32 %v660, 7
        %v662 = vsub.s32 4, %v661
        %v663 = vrot.slane %v600, %v662
        %v664 = vlaneseq
        %v665 = vshrl.u32 %v664, 7
        %v666 = vsub.s32 0, %v665
        %v667 = vrot.slane %v601, %v666
        %v668 = vlaneseq
        %v669 = vshrl.u32 %v668, 7
        %v670 = vsub.s32 4, %v669
        %v671 = vrot.slane %v601, %v670
        %v676 = vlaneseq
        %v677 = vshrl.u32 %v676, 7
        %v678 = vsub.s32 0, %v677
        %v679 = vrot.slane %v659, %v678
        %v680 = vlaneseq
        %v681 = vshrl.u32 %v680, 7
        %v682 = vsub.s32 0, %v681
        %v683 = vrot.slane %v663, %v682
        %v684 = vlaneseq
        %v685 = vshrl.u32 %v684, 7
        %v686 = vsub.s32 0, %v685
        %v687 = vrot.slane %v667, %v686
        %v688 = vlaneseq
        %v689 = vshrl.u32 %v688, 7
        %v690 = vsub.s32 0, %v689
        %v691 = vrot.slane %v671, %v690
        %v692 = vsel %vm504, %v679, 0.0
        %v693 = vsel %vm505, %v683, 0.0
        %v694 = vsel %vm506, %v687, 0.0
        %v695 = vsel %vm507, %v691, 0.0
        %v696 = vadd.f32 %v650, %v692
        %v697 = vadd.f32 %v651, %v693
        %v698 = vadd.f32 %v652, %v694
        %v699 = vadd.f32 %v653, %v695
        %v700 = vadd.f32 %v600, %v610
        %v701 = vadd.f32 %v601, %v611
        %v702 = vld [vmem:[%s3] sm:$0xff]
        %704 = vset.pattern.permute.xlu0 0
        %705 = vperm.xlu0 %704, %v702
        %v706 = vpop.permute.xlu0 %705
        %v710 = vlaneseq
        %v711 = vshrl.u32 %v710, 7
        %v712 = vsub.s32 0, %v711
        %v713 = vrot.slane %v356, %v712
        %v714 = vlaneseq
        %v715 = vshrl.u32 %v714, 7
        %v716 = vsub.s32 4, %v715
        %v717 = vrot.slane %v356, %v716
        %v718 = vlaneseq
        %v719 = vshrl.u32 %v718, 7
        %v720 = vsub.s32 0, %v719
        %v721 = vrot.slane %v357, %v720
        %v722 = vlaneseq
        %v723 = vshrl.u32 %v722, 7
        %v724 = vsub.s32 4, %v723
        %v725 = vrot.slane %v357, %v724
        %v730 = vlaneseq
        %v731 = vshrl.u32 %v730, 7
        %v732 = vsub.s32 0, %v731
        %v733 = vrot.slane %v713, %v732
        %v734 = vlaneseq
        %v735 = vshrl.u32 %v734, 7
        %v736 = vsub.s32 0, %v735
        %v737 = vrot.slane %v717, %v736
        %v738 = vlaneseq
        %v739 = vshrl.u32 %v738, 7
        %v740 = vsub.s32 0, %v739
        %v741 = vrot.slane %v721, %v740
        %v742 = vlaneseq
        %v743 = vshrl.u32 %v742, 7
        %v744 = vsub.s32 0, %v743
        %v745 = vrot.slane %v725, %v744
        %vm746 = vcmp.lt.f32.partialorder %v706, %v733
        %vm747 = vcmp.lt.f32.partialorder %v706, %v737
        %vm748 = vcmp.lt.f32.partialorder %v706, %v741
        %vm749 = vcmp.lt.f32.partialorder %v706, %v745
        %v750 = vsel %vm746, 1, 0
        %v751 = vsel %vm747, 1, 0
        %v752 = vsel %vm748, 1, 0
        %v753 = vsel %vm749, 1, 0
        %v754 = vrot.slane %v750, 4
        %v755 = vadd.s32 %v750, %v754
        %v756 = vrot.slane %v755, 2
        %v757 = vadd.s32 %v755, %v756
        %v758 = vrot.slane %v757, 1
        %v759 = vadd.s32 %v757, %v758
        %v760 = vrot.slane %v751, 4
        %v761 = vadd.s32 %v751, %v760
        %v762 = vrot.slane %v761, 2
        %v763 = vadd.s32 %v761, %v762
        %v764 = vrot.slane %v763, 1
        %v765 = vadd.s32 %v763, %v764
        %v766 = vrot.slane %v752, 4
        %v767 = vadd.s32 %v752, %v766
        %v768 = vrot.slane %v767, 2
        %v769 = vadd.s32 %v767, %v768
        %v770 = vrot.slane %v769, 1
        %v771 = vadd.s32 %v769, %v770
        %v772 = vrot.slane %v753, 4
        %v773 = vadd.s32 %v753, %v772
        %v774 = vrot.slane %v773, 2
        %v775 = vadd.s32 %v773, %v774
        %v776 = vrot.slane %v775, 1
        %v777 = vadd.s32 %v775, %v776
        %vm778 = vcmp.lt.s32.totalorder %v759, 7
        %v779 = vsel %vm778, %v759, 7
        %vm780 = vcmp.lt.s32.totalorder %v765, 7
        %v781 = vsel %vm780, %v765, 7
        %vm782 = vcmp.lt.s32.totalorder %v771, 7
        %v783 = vsel %vm782, %v771, 7
        %vm784 = vcmp.lt.s32.totalorder %v777, 7
        %v785 = vsel %vm784, %v777, 7
        %v786 = vsub.s32 %v779, 1
        %v787 = vsub.s32 %v781, 1
        %v788 = vsub.s32 %v783, 1
        %v789 = vsub.s32 %v785, 1
        %vm790 = vcmp.gt.s32.totalorder %v786, 0
        %v791 = vsel %vm790, %v786, 0
        %vm792 = vcmp.gt.s32.totalorder %v787, 0
        %v793 = vsel %vm792, %v787, 0
        %vm794 = vcmp.gt.s32.totalorder %v788, 0
        %v795 = vsel %vm794, %v788, 0
        %vm796 = vcmp.gt.s32.totalorder %v789, 0
        %v797 = vsel %vm796, %v789, 0
        %vm798 = vcmp.lt.s32.totalorder %v791, 7
        %v799 = vsel %vm798, %v791, 7
        %vm800 = vcmp.lt.s32.totalorder %v793, 7
        %v801 = vsel %vm800, %v793, 7
        %vm802 = vcmp.lt.s32.totalorder %v795, 7
        %v803 = vsel %vm802, %v795, 7
        %vm804 = vcmp.lt.s32.totalorder %v797, 7
        %v805 = vsel %vm804, %v797, 7
        %vm806 = vcmp.eq.s32.totalorder %v499, %v799
        %vm807 = vcmp.eq.s32.totalorder %v499, %v801
        %vm808 = vcmp.eq.s32.totalorder %v499, %v803
        %vm809 = vcmp.eq.s32.totalorder %v499, %v805
        %vm810 = vcmp.eq.s32.totalorder %v499, %v779
        %vm811 = vcmp.eq.s32.totalorder %v499, %v781
        %vm812 = vcmp.eq.s32.totalorder %v499, %v783
        %vm813 = vcmp.eq.s32.totalorder %v499, %v785
        %v814 = vsel %vm806, %v706, 0.0
        %v815 = vsel %vm807, %v706, 0.0
        %v816 = vsel %vm808, %v706, 0.0
        %v817 = vsel %vm809, %v706, 0.0
        %v818 = vrot.slane %v814, 4
        %v819 = vadd.f32 %v814, %v818
        %v820 = vrot.slane %v819, 2
        %v821 = vadd.f32 %v819, %v820
        %v822 = vrot.slane %v821, 1
        %v823 = vadd.f32 %v821, %v822
        %v824 = vrot.slane %v815, 4
        %v825 = vadd.f32 %v815, %v824
        %v826 = vrot.slane %v825, 2
        %v827 = vadd.f32 %v825, %v826
        %v828 = vrot.slane %v827, 1
        %v829 = vadd.f32 %v827, %v828
        %v830 = vrot.slane %v816, 4
        %v831 = vadd.f32 %v816, %v830
        %v832 = vrot.slane %v831, 2
        %v833 = vadd.f32 %v831, %v832
        %v834 = vrot.slane %v833, 1
        %v835 = vadd.f32 %v833, %v834
        %v836 = vrot.slane %v817, 4
        %v837 = vadd.f32 %v817, %v836
        %v838 = vrot.slane %v837, 2
        %v839 = vadd.f32 %v837, %v838
        %v840 = vrot.slane %v839, 1
        %v841 = vadd.f32 %v839, %v840
        %v842 = vsel %vm810, %v706, 0.0
        %v843 = vsel %vm811, %v706, 0.0
        %v844 = vsel %vm812, %v706, 0.0
        %v845 = vsel %vm813, %v706, 0.0
        %v846 = vrot.slane %v842, 4
        %v847 = vadd.f32 %v842, %v846
        %v848 = vrot.slane %v847, 2
        %v849 = vadd.f32 %v847, %v848
        %v850 = vrot.slane %v849, 1
        %v851 = vadd.f32 %v849, %v850
        %v852 = vrot.slane %v843, 4
        %v853 = vadd.f32 %v843, %v852
        %v854 = vrot.slane %v853, 2
        %v855 = vadd.f32 %v853, %v854
        %v856 = vrot.slane %v855, 1
        %v857 = vadd.f32 %v855, %v856
        %v858 = vrot.slane %v844, 4
        %v859 = vadd.f32 %v844, %v858
        %v860 = vrot.slane %v859, 2
        %v861 = vadd.f32 %v859, %v860
        %v862 = vrot.slane %v861, 1
        %v863 = vadd.f32 %v861, %v862
        %v864 = vrot.slane %v845, 4
        %v865 = vadd.f32 %v845, %v864
        %v866 = vrot.slane %v865, 2
        %v867 = vadd.f32 %v865, %v866
        %v868 = vrot.slane %v867, 1
        %v869 = vadd.f32 %v867, %v868
        %v874 = vcombine.low %v823, %v829
        %v875 = vcombine.low %v835, %v841
        %v878 = vsub.f32 %v356, %v874
        %v879 = vsub.f32 %v357, %v875
        %v880 = vmax.f32 %v878, 0.0
        %v881 = vmax.f32 %v879, 0.0
        %v882 = vsub.f32 %v851, %v713
        %v883 = vsub.f32 %v857, %v717
        %v884 = vsub.f32 %v863, %v721
        %v885 = vsub.f32 %v869, %v725
        %v886 = vmax.f32 %v882, 0.0
        %v887 = vmax.f32 %v883, 0.0
        %v888 = vmax.f32 %v884, 0.0
        %v889 = vmax.f32 %v885, 0.0
        %vm890 = vcmp.eq.f32.partialorder %v880, 0.0
        %vm891 = vcmp.eq.f32.partialorder %v881, 0.0
        %vm892 = vcmp.eq.f32.partialorder %v886, 0.0
        %vm893 = vcmp.eq.f32.partialorder %v887, 0.0
        %vm894 = vcmp.eq.f32.partialorder %v888, 0.0
        %vm895 = vcmp.eq.f32.partialorder %v889, 0.0
        %v896 = vsel %vm892, 1, 0
        %v897 = vsel %vm893, 1, 0
        %v898 = vsel %vm894, 1, 0
        %v899 = vsel %vm895, 1, 0
        %v900 = vcombine.low %v896, %v897
        %v901 = vcombine.low %v898, %v899
        %vm902 = vcmp.ne.s32.totalorder %v900, 0
        %vm903 = vcmp.ne.s32.totalorder %v901, 0
        %vm904 = vmand %vm890, %vm902
        %vm905 = vmand %vm891, %vm903
        %v906 = vsel %vm904, 1.0, %v880
        %v907 = vsel %vm905, 1.0, %v881
        %v912 = vcombine.low %v886, %v887
        %v913 = vcombine.low %v888, %v889
        %v916 = vsel %vm904, 1.0, %v912
        %v917 = vsel %vm905, 1.0, %v913
        %v920 = vlaneseq
        %v921 = vshrl.u32 %v920, 7
        %v922 = vsub.s32 0, %v921
        %v923 = vrot.slane %v916, %v922
        %v924 = vlaneseq
        %v925 = vshrl.u32 %v924, 7
        %v926 = vsub.s32 4, %v925
        %v927 = vrot.slane %v916, %v926
        %v928 = vlaneseq
        %v929 = vshrl.u32 %v928, 7
        %v930 = vsub.s32 0, %v929
        %v931 = vrot.slane %v917, %v930
        %v932 = vlaneseq
        %v933 = vshrl.u32 %v932, 7
        %v934 = vsub.s32 4, %v933
        %v935 = vrot.slane %v917, %v934
        %v940 = vlaneseq
        %v941 = vshrl.u32 %v940, 7
        %v942 = vsub.s32 0, %v941
        %v943 = vrot.slane %v923, %v942
        %v944 = vlaneseq
        %v945 = vshrl.u32 %v944, 7
        %v946 = vsub.s32 0, %v945
        %v947 = vrot.slane %v927, %v946
        %v948 = vlaneseq
        %v949 = vshrl.u32 %v948, 7
        %v950 = vsub.s32 0, %v949
        %v951 = vrot.slane %v931, %v950
        %v952 = vlaneseq
        %v953 = vshrl.u32 %v952, 7
        %v954 = vsub.s32 0, %v953
        %v955 = vrot.slane %v935, %v954
        %v956 = vsel %vm806, %v943, 0.0
        %v957 = vsel %vm807, %v947, 0.0
        %v958 = vsel %vm808, %v951, 0.0
        %v959 = vsel %vm809, %v955, 0.0
        %v962 = vlaneseq
        %v963 = vshrl.u32 %v962, 7
        %v964 = vsub.s32 0, %v963
        %v965 = vrot.slane %v906, %v964
        %v966 = vlaneseq
        %v967 = vshrl.u32 %v966, 7
        %v968 = vsub.s32 4, %v967
        %v969 = vrot.slane %v906, %v968
        %v970 = vlaneseq
        %v971 = vshrl.u32 %v970, 7
        %v972 = vsub.s32 0, %v971
        %v973 = vrot.slane %v907, %v972
        %v974 = vlaneseq
        %v975 = vshrl.u32 %v974, 7
        %v976 = vsub.s32 4, %v975
        %v977 = vrot.slane %v907, %v976
        %v982 = vlaneseq
        %v983 = vshrl.u32 %v982, 7
        %v984 = vsub.s32 0, %v983
        %v985 = vrot.slane %v965, %v984
        %v986 = vlaneseq
        %v987 = vshrl.u32 %v986, 7
        %v988 = vsub.s32 0, %v987
        %v989 = vrot.slane %v969, %v988
        %v990 = vlaneseq
        %v991 = vshrl.u32 %v990, 7
        %v992 = vsub.s32 0, %v991
        %v993 = vrot.slane %v973, %v992
        %v994 = vlaneseq
        %v995 = vshrl.u32 %v994, 7
        %v996 = vsub.s32 0, %v995
        %v997 = vrot.slane %v977, %v996
        %v998 = vsel %vm810, %v985, 0.0
        %v999 = vsel %vm811, %v989, 0.0
        %v1000 = vsel %vm812, %v993, 0.0
        %v1001 = vsel %vm813, %v997, 0.0
        %v1002 = vadd.f32 %v956, %v998
        %v1003 = vadd.f32 %v957, %v999
        %v1004 = vadd.f32 %v958, %v1000
        %v1005 = vadd.f32 %v959, %v1001
        %v1006 = vadd.f32 %v906, %v916
        %v1007 = vadd.f32 %v907, %v917
        %v1008 = vld [vmem:[%s4] sm:$0xff]
        %1010 = vset.pattern.permute.xlu0 0
        %1011 = vperm.xlu0 %1010, %v1008
        %v1012 = vpop.permute.xlu0 %1011
        %v1016 = vlaneseq
        %v1017 = vshrl.u32 %v1016, 7
        %v1018 = vsub.s32 0, %v1017
        %v1019 = vrot.slane %v392, %v1018
        %v1020 = vlaneseq
        %v1021 = vshrl.u32 %v1020, 7
        %v1022 = vsub.s32 4, %v1021
        %v1023 = vrot.slane %v392, %v1022
        %v1024 = vlaneseq
        %v1025 = vshrl.u32 %v1024, 7
        %v1026 = vsub.s32 0, %v1025
        %v1027 = vrot.slane %v393, %v1026
        %v1028 = vlaneseq
        %v1029 = vshrl.u32 %v1028, 7
        %v1030 = vsub.s32 4, %v1029
        %v1031 = vrot.slane %v393, %v1030
        %v1036 = vlaneseq
        %v1037 = vshrl.u32 %v1036, 7
        %v1038 = vsub.s32 0, %v1037
        %v1039 = vrot.slane %v1019, %v1038
        %v1040 = vlaneseq
        %v1041 = vshrl.u32 %v1040, 7
        %v1042 = vsub.s32 0, %v1041
        %v1043 = vrot.slane %v1023, %v1042
        %v1044 = vlaneseq
        %v1045 = vshrl.u32 %v1044, 7
        %v1046 = vsub.s32 0, %v1045
        %v1047 = vrot.slane %v1027, %v1046
        %v1048 = vlaneseq
        %v1049 = vshrl.u32 %v1048, 7
        %v1050 = vsub.s32 0, %v1049
        %v1051 = vrot.slane %v1031, %v1050
        %vm1052 = vcmp.lt.f32.partialorder %v1012, %v1039
        %vm1053 = vcmp.lt.f32.partialorder %v1012, %v1043
        %vm1054 = vcmp.lt.f32.partialorder %v1012, %v1047
        %vm1055 = vcmp.lt.f32.partialorder %v1012, %v1051
        %v1056 = vsel %vm1052, 1, 0
        %v1057 = vsel %vm1053, 1, 0
        %v1058 = vsel %vm1054, 1, 0
        %v1059 = vsel %vm1055, 1, 0
        %v1060 = vrot.slane %v1056, 4
        %v1061 = vadd.s32 %v1056, %v1060
        %v1062 = vrot.slane %v1061, 2
        %v1063 = vadd.s32 %v1061, %v1062
        %v1064 = vrot.slane %v1063, 1
        %v1065 = vadd.s32 %v1063, %v1064
        %v1066 = vrot.slane %v1057, 4
        %v1067 = vadd.s32 %v1057, %v1066
        %v1068 = vrot.slane %v1067, 2
        %v1069 = vadd.s32 %v1067, %v1068
        %v1070 = vrot.slane %v1069, 1
        %v1071 = vadd.s32 %v1069, %v1070
        %v1072 = vrot.slane %v1058, 4
        %v1073 = vadd.s32 %v1058, %v1072
        %v1074 = vrot.slane %v1073, 2
        %v1075 = vadd.s32 %v1073, %v1074
        %v1076 = vrot.slane %v1075, 1
        %v1077 = vadd.s32 %v1075, %v1076
        %v1078 = vrot.slane %v1059, 4
        %v1079 = vadd.s32 %v1059, %v1078
        %v1080 = vrot.slane %v1079, 2
        %v1081 = vadd.s32 %v1079, %v1080
        %v1082 = vrot.slane %v1081, 1
        %v1083 = vadd.s32 %v1081, %v1082
        %vm1084 = vcmp.lt.s32.totalorder %v1065, 7
        %v1085 = vsel %vm1084, %v1065, 7
        %vm1086 = vcmp.lt.s32.totalorder %v1071, 7
        %v1087 = vsel %vm1086, %v1071, 7
        %vm1088 = vcmp.lt.s32.totalorder %v1077, 7
        %v1089 = vsel %vm1088, %v1077, 7
        %vm1090 = vcmp.lt.s32.totalorder %v1083, 7
        %v1091 = vsel %vm1090, %v1083, 7
        %v1092 = vsub.s32 %v1085, 1
        %v1093 = vsub.s32 %v1087, 1
        %v1094 = vsub.s32 %v1089, 1
        %v1095 = vsub.s32 %v1091, 1
        %vm1096 = vcmp.gt.s32.totalorder %v1092, 0
        %v1097 = vsel %vm1096, %v1092, 0
        %vm1098 = vcmp.gt.s32.totalorder %v1093, 0
        %v1099 = vsel %vm1098, %v1093, 0
        %vm1100 = vcmp.gt.s32.totalorder %v1094, 0
        %v1101 = vsel %vm1100, %v1094, 0
        %vm1102 = vcmp.gt.s32.totalorder %v1095, 0
        %v1103 = vsel %vm1102, %v1095, 0
        %vm1104 = vcmp.lt.s32.totalorder %v1097, 7
        %v1105 = vsel %vm1104, %v1097, 7
        %vm1106 = vcmp.lt.s32.totalorder %v1099, 7
        %v1107 = vsel %vm1106, %v1099, 7
        %vm1108 = vcmp.lt.s32.totalorder %v1101, 7
        %v1109 = vsel %vm1108, %v1101, 7
        %vm1110 = vcmp.lt.s32.totalorder %v1103, 7
        %v1111 = vsel %vm1110, %v1103, 7
        %vm1112 = vcmp.eq.s32.totalorder %v499, %v1105
        %vm1113 = vcmp.eq.s32.totalorder %v499, %v1107
        %vm1114 = vcmp.eq.s32.totalorder %v499, %v1109
        %vm1115 = vcmp.eq.s32.totalorder %v499, %v1111
        %vm1116 = vcmp.eq.s32.totalorder %v499, %v1085
        %vm1117 = vcmp.eq.s32.totalorder %v499, %v1087
        %vm1118 = vcmp.eq.s32.totalorder %v499, %v1089
        %vm1119 = vcmp.eq.s32.totalorder %v499, %v1091
        %v1120 = vsel %vm1112, %v1012, 0.0
        %v1121 = vsel %vm1113, %v1012, 0.0
        %v1122 = vsel %vm1114, %v1012, 0.0
        %v1123 = vsel %vm1115, %v1012, 0.0
        %v1124 = vrot.slane %v1120, 4
        %v1125 = vadd.f32 %v1120, %v1124
        %v1126 = vrot.slane %v1125, 2
        %v1127 = vadd.f32 %v1125, %v1126
        %v1128 = vrot.slane %v1127, 1
        %v1129 = vadd.f32 %v1127, %v1128
        %v1130 = vrot.slane %v1121, 4
        %v1131 = vadd.f32 %v1121, %v1130
        %v1132 = vrot.slane %v1131, 2
        %v1133 = vadd.f32 %v1131, %v1132
        %v1134 = vrot.slane %v1133, 1
        %v1135 = vadd.f32 %v1133, %v1134
        %v1136 = vrot.slane %v1122, 4
        %v1137 = vadd.f32 %v1122, %v1136
        %v1138 = vrot.slane %v1137, 2
        %v1139 = vadd.f32 %v1137, %v1138
        %v1140 = vrot.slane %v1139, 1
        %v1141 = vadd.f32 %v1139, %v1140
        %v1142 = vrot.slane %v1123, 4
        %v1143 = vadd.f32 %v1123, %v1142
        %v1144 = vrot.slane %v1143, 2
        %v1145 = vadd.f32 %v1143, %v1144
        %v1146 = vrot.slane %v1145, 1
        %v1147 = vadd.f32 %v1145, %v1146
        %v1148 = vsel %vm1116, %v1012, 0.0
        %v1149 = vsel %vm1117, %v1012, 0.0
        %v1150 = vsel %vm1118, %v1012, 0.0
        %v1151 = vsel %vm1119, %v1012, 0.0
        %v1152 = vrot.slane %v1148, 4
        %v1153 = vadd.f32 %v1148, %v1152
        %v1154 = vrot.slane %v1153, 2
        %v1155 = vadd.f32 %v1153, %v1154
        %v1156 = vrot.slane %v1155, 1
        %v1157 = vadd.f32 %v1155, %v1156
        %v1158 = vrot.slane %v1149, 4
        %v1159 = vadd.f32 %v1149, %v1158
        %v1160 = vrot.slane %v1159, 2
        %v1161 = vadd.f32 %v1159, %v1160
        %v1162 = vrot.slane %v1161, 1
        %v1163 = vadd.f32 %v1161, %v1162
        %v1164 = vrot.slane %v1150, 4
        %v1165 = vadd.f32 %v1150, %v1164
        %v1166 = vrot.slane %v1165, 2
        %v1167 = vadd.f32 %v1165, %v1166
        %v1168 = vrot.slane %v1167, 1
        %v1169 = vadd.f32 %v1167, %v1168
        %v1170 = vrot.slane %v1151, 4
        %v1171 = vadd.f32 %v1151, %v1170
        %v1172 = vrot.slane %v1171, 2
        %v1173 = vadd.f32 %v1171, %v1172
        %v1174 = vrot.slane %v1173, 1
        %v1175 = vadd.f32 %v1173, %v1174
        %v1180 = vcombine.low %v1129, %v1135
        %v1181 = vcombine.low %v1141, %v1147
        %v1184 = vsub.f32 %v392, %v1180
        %v1185 = vsub.f32 %v393, %v1181
        %v1186 = vmax.f32 %v1184, 0.0
        %v1187 = vmax.f32 %v1185, 0.0
        %v1188 = vsub.f32 %v1157, %v1019
        %v1189 = vsub.f32 %v1163, %v1023
        %v1190 = vsub.f32 %v1169, %v1027
        %v1191 = vsub.f32 %v1175, %v1031
        %v1192 = vmax.f32 %v1188, 0.0
        %v1193 = vmax.f32 %v1189, 0.0
        %v1194 = vmax.f32 %v1190, 0.0
        %v1195 = vmax.f32 %v1191, 0.0
        %vm1196 = vcmp.eq.f32.partialorder %v1186, 0.0
        %vm1197 = vcmp.eq.f32.partialorder %v1187, 0.0
        %vm1198 = vcmp.eq.f32.partialorder %v1192, 0.0
        %vm1199 = vcmp.eq.f32.partialorder %v1193, 0.0
        %vm1200 = vcmp.eq.f32.partialorder %v1194, 0.0
        %vm1201 = vcmp.eq.f32.partialorder %v1195, 0.0
        %v1202 = vsel %vm1198, 1, 0
        %v1203 = vsel %vm1199, 1, 0
        %v1204 = vsel %vm1200, 1, 0
        %v1205 = vsel %vm1201, 1, 0
        %v1206 = vcombine.low %v1202, %v1203
        %v1207 = vcombine.low %v1204, %v1205
        %vm1208 = vcmp.ne.s32.totalorder %v1206, 0
        %vm1209 = vcmp.ne.s32.totalorder %v1207, 0
        %vm1210 = vmand %vm1196, %vm1208
        %vm1211 = vmand %vm1197, %vm1209
        %v1212 = vsel %vm1210, 1.0, %v1186
        %v1213 = vsel %vm1211, 1.0, %v1187
        %v1218 = vcombine.low %v1192, %v1193
        %v1219 = vcombine.low %v1194, %v1195
        %v1222 = vsel %vm1210, 1.0, %v1218
        %v1223 = vsel %vm1211, 1.0, %v1219
        %v1226 = vlaneseq
        %v1227 = vshrl.u32 %v1226, 7
        %v1228 = vsub.s32 0, %v1227
        %v1229 = vrot.slane %v1222, %v1228
        %v1230 = vlaneseq
        %v1231 = vshrl.u32 %v1230, 7
        %v1232 = vsub.s32 4, %v1231
        %v1233 = vrot.slane %v1222, %v1232
        %v1234 = vlaneseq
        %v1235 = vshrl.u32 %v1234, 7
        %v1236 = vsub.s32 0, %v1235
        %v1237 = vrot.slane %v1223, %v1236
        %v1238 = vlaneseq
        %v1239 = vshrl.u32 %v1238, 7
        %v1240 = vsub.s32 4, %v1239
        %v1241 = vrot.slane %v1223, %v1240
        %v1246 = vlaneseq
        %v1247 = vshrl.u32 %v1246, 7
        %v1248 = vsub.s32 0, %v1247
        %v1249 = vrot.slane %v1229, %v1248
        %v1250 = vlaneseq
        %v1251 = vshrl.u32 %v1250, 7
        %v1252 = vsub.s32 0, %v1251
        %v1253 = vrot.slane %v1233, %v1252
        %v1254 = vlaneseq
        %v1255 = vshrl.u32 %v1254, 7
        %v1256 = vsub.s32 0, %v1255
        %v1257 = vrot.slane %v1237, %v1256
        %v1258 = vlaneseq
        %v1259 = vshrl.u32 %v1258, 7
        %v1260 = vsub.s32 0, %v1259
        %v1261 = vrot.slane %v1241, %v1260
        %v1262 = vsel %vm1112, %v1249, 0.0
        %v1263 = vsel %vm1113, %v1253, 0.0
        %v1264 = vsel %vm1114, %v1257, 0.0
        %v1265 = vsel %vm1115, %v1261, 0.0
        %v1268 = vlaneseq
        %v1269 = vshrl.u32 %v1268, 7
        %v1270 = vsub.s32 0, %v1269
        %v1271 = vrot.slane %v1212, %v1270
        %v1272 = vlaneseq
        %v1273 = vshrl.u32 %v1272, 7
        %v1274 = vsub.s32 4, %v1273
        %v1275 = vrot.slane %v1212, %v1274
        %v1276 = vlaneseq
        %v1277 = vshrl.u32 %v1276, 7
        %v1278 = vsub.s32 0, %v1277
        %v1279 = vrot.slane %v1213, %v1278
        %v1280 = vlaneseq
        %v1281 = vshrl.u32 %v1280, 7
        %v1282 = vsub.s32 4, %v1281
        %v1283 = vrot.slane %v1213, %v1282
        %v1288 = vlaneseq
        %v1289 = vshrl.u32 %v1288, 7
        %v1290 = vsub.s32 0, %v1289
        %v1291 = vrot.slane %v1271, %v1290
        %v1292 = vlaneseq
        %v1293 = vshrl.u32 %v1292, 7
        %v1294 = vsub.s32 0, %v1293
        %v1295 = vrot.slane %v1275, %v1294
        %v1296 = vlaneseq
        %v1297 = vshrl.u32 %v1296, 7
        %v1298 = vsub.s32 0, %v1297
        %v1299 = vrot.slane %v1279, %v1298
        %v1300 = vlaneseq
        %v1301 = vshrl.u32 %v1300, 7
        %v1302 = vsub.s32 0, %v1301
        %v1303 = vrot.slane %v1283, %v1302
        %v1304 = vsel %vm1116, %v1291, 0.0
        %v1305 = vsel %vm1117, %v1295, 0.0
        %v1306 = vsel %vm1118, %v1299, 0.0
        %v1307 = vsel %vm1119, %v1303, 0.0
        %v1308 = vadd.f32 %v1262, %v1304
        %v1309 = vadd.f32 %v1263, %v1305
        %v1310 = vadd.f32 %v1264, %v1306
        %v1311 = vadd.f32 %v1265, %v1307
        %v1312 = vadd.f32 %v1212, %v1222
        %v1313 = vadd.f32 %v1213, %v1223
        %v1318 = vcombine.low %v1002, %v1003
        %v1319 = vcombine.high %v1002, %v1003
        %v1320 = vcombine.low %v1004, %v1005
        %v1321 = vcombine.high %v1004, %v1005
        %v1323 = vunpack.c.l.s4 1966171168
        %v1324 = vunpack.c.0.s8 %v1323
        %v1325 = vlaneseq
        %v1326 = vshrl.u32 %v1325, 7
        %v1327 = vsub.s32 %v1324, %v1326
        %v1328 = vrot.slane %v1318, %v1327
        %v1330 = vunpack.c.l.s4 1966171168
        %v1331 = vunpack.c.0.s8 %v1330
        %v1332 = vlaneseq
        %v1333 = vshrl.u32 %v1332, 7
        %v1334 = vsub.s32 %v1331, %v1333
        %v1335 = vrot.slane %v1319, %v1334
        %v1337 = vunpack.c.l.s4 1966171168
        %v1338 = vunpack.c.0.s8 %v1337
        %v1339 = vlaneseq
        %v1340 = vshrl.u32 %v1339, 7
        %v1341 = vsub.s32 %v1338, %v1340
        %v1342 = vrot.slane %v1320, %v1341
        %v1344 = vunpack.c.l.s4 1966171168
        %v1345 = vunpack.c.0.s8 %v1344
        %v1346 = vlaneseq
        %v1347 = vshrl.u32 %v1346, 7
        %v1348 = vsub.s32 %v1345, %v1347
        %v1349 = vrot.slane %v1321, %v1348
        %v1350 = vcombine.low %v1328, %v1342
        %v1351 = vcombine.high %v1328, %v1342
        %v1352 = vcombine.low %v1335, %v1349
        %v1353 = vcombine.high %v1335, %v1349
        %v1355 = vunpack.c.l.s4 1966171168
        %v1356 = vunpack.c.0.s8 %v1355
        %v1357 = vlaneseq
        %v1358 = vshrl.u32 %v1357, 7
        %v1359 = vsub.s32 %v1356, %v1358
        %v1360 = vrot.slane %v1350, %v1359
        %v1362 = vunpack.c.l.s4 1966171168
        %v1363 = vunpack.c.0.s8 %v1362
        %v1364 = vlaneseq
        %v1365 = vshrl.u32 %v1364, 7
        %v1366 = vsub.s32 %v1363, %v1365
        %v1367 = vrot.slane %v1352, %v1366
        %v1369 = vunpack.c.l.s4 1966171168
        %v1370 = vunpack.c.0.s8 %v1369
        %v1371 = vlaneseq
        %v1372 = vshrl.u32 %v1371, 7
        %v1373 = vsub.s32 %v1370, %v1372
        %v1374 = vrot.slane %v1351, %v1373
        %v1376 = vunpack.c.l.s4 1966171168
        %v1377 = vunpack.c.0.s8 %v1376
        %v1378 = vlaneseq
        %v1379 = vshrl.u32 %v1378, 7
        %v1380 = vsub.s32 %v1377, %v1379
        %v1381 = vrot.slane %v1353, %v1380
        %v1382 = vcombine.high %v1360, %v1360
        %v1383 = vcombine.high %v1367, %v1367
        %v1384 = vcombine.high %v1374, %v1374
        %v1385 = vcombine.high %v1381, %v1381
        %v1386 = vlaneseq
        %v1387 = vshrl.u32 %v1386, 7
        %v1388 = vsub.s32 0, %v1387
        %v1389 = vrot.slane %v1360, %v1388
        %v1390 = vlaneseq
        %v1391 = vshrl.u32 %v1390, 7
        %v1392 = vsub.s32 1, %v1391
        %v1393 = vrot.slane %v1360, %v1392
        %v1394 = vlaneseq
        %v1395 = vshrl.u32 %v1394, 7
        %v1396 = vsub.s32 2, %v1395
        %v1397 = vrot.slane %v1360, %v1396
        %v1398 = vlaneseq
        %v1399 = vshrl.u32 %v1398, 7
        %v1400 = vsub.s32 3, %v1399
        %v1401 = vrot.slane %v1360, %v1400
        %v1402 = vlaneseq
        %v1403 = vshrl.u32 %v1402, 7
        %v1404 = vsub.s32 0, %v1403
        %v1405 = vrot.slane %v1374, %v1404
        %v1406 = vlaneseq
        %v1407 = vshrl.u32 %v1406, 7
        %v1408 = vsub.s32 1, %v1407
        %v1409 = vrot.slane %v1374, %v1408
        %v1410 = vlaneseq
        %v1411 = vshrl.u32 %v1410, 7
        %v1412 = vsub.s32 2, %v1411
        %v1413 = vrot.slane %v1374, %v1412
        %v1414 = vlaneseq
        %v1415 = vshrl.u32 %v1414, 7
        %v1416 = vsub.s32 3, %v1415
        %v1417 = vrot.slane %v1374, %v1416
        %v1418 = vlaneseq
        %v1419 = vshrl.u32 %v1418, 7
        %v1420 = vsub.s32 0, %v1419
        %v1421 = vrot.slane %v1382, %v1420
        %v1422 = vlaneseq
        %v1423 = vshrl.u32 %v1422, 7
        %v1424 = vsub.s32 1, %v1423
        %v1425 = vrot.slane %v1382, %v1424
        %v1426 = vlaneseq
        %v1427 = vshrl.u32 %v1426, 7
        %v1428 = vsub.s32 2, %v1427
        %v1429 = vrot.slane %v1382, %v1428
        %v1430 = vlaneseq
        %v1431 = vshrl.u32 %v1430, 7
        %v1432 = vsub.s32 3, %v1431
        %v1433 = vrot.slane %v1382, %v1432
        %v1434 = vlaneseq
        %v1435 = vshrl.u32 %v1434, 7
        %v1436 = vsub.s32 0, %v1435
        %v1437 = vrot.slane %v1384, %v1436
        %v1438 = vlaneseq
        %v1439 = vshrl.u32 %v1438, 7
        %v1440 = vsub.s32 1, %v1439
        %v1441 = vrot.slane %v1384, %v1440
        %v1442 = vlaneseq
        %v1443 = vshrl.u32 %v1442, 7
        %v1444 = vsub.s32 2, %v1443
        %v1445 = vrot.slane %v1384, %v1444
        %v1446 = vlaneseq
        %v1447 = vshrl.u32 %v1446, 7
        %v1448 = vsub.s32 3, %v1447
        %v1449 = vrot.slane %v1384, %v1448
        %v1450 = vlaneseq
        %v1451 = vshrl.u32 %v1450, 7
        %v1452 = vsub.s32 0, %v1451
        %v1453 = vrot.slane %v1367, %v1452
        %v1454 = vlaneseq
        %v1455 = vshrl.u32 %v1454, 7
        %v1456 = vsub.s32 1, %v1455
        %v1457 = vrot.slane %v1367, %v1456
        %v1458 = vlaneseq
        %v1459 = vshrl.u32 %v1458, 7
        %v1460 = vsub.s32 2, %v1459
        %v1461 = vrot.slane %v1367, %v1460
        %v1462 = vlaneseq
        %v1463 = vshrl.u32 %v1462, 7
        %v1464 = vsub.s32 3, %v1463
        %v1465 = vrot.slane %v1367, %v1464
        %v1466 = vlaneseq
        %v1467 = vshrl.u32 %v1466, 7
        %v1468 = vsub.s32 0, %v1467
        %v1469 = vrot.slane %v1381, %v1468
        %v1470 = vlaneseq
        %v1471 = vshrl.u32 %v1470, 7
        %v1472 = vsub.s32 1, %v1471
        %v1473 = vrot.slane %v1381, %v1472
        %v1474 = vlaneseq
        %v1475 = vshrl.u32 %v1474, 7
        %v1476 = vsub.s32 2, %v1475
        %v1477 = vrot.slane %v1381, %v1476
        %v1478 = vlaneseq
        %v1479 = vshrl.u32 %v1478, 7
        %v1480 = vsub.s32 3, %v1479
        %v1481 = vrot.slane %v1381, %v1480
        %v1482 = vlaneseq
        %v1483 = vshrl.u32 %v1482, 7
        %v1484 = vsub.s32 0, %v1483
        %v1485 = vrot.slane %v1383, %v1484
        %v1486 = vlaneseq
        %v1487 = vshrl.u32 %v1486, 7
        %v1488 = vsub.s32 1, %v1487
        %v1489 = vrot.slane %v1383, %v1488
        %v1490 = vlaneseq
        %v1491 = vshrl.u32 %v1490, 7
        %v1492 = vsub.s32 2, %v1491
        %v1493 = vrot.slane %v1383, %v1492
        %v1494 = vlaneseq
        %v1495 = vshrl.u32 %v1494, 7
        %v1496 = vsub.s32 3, %v1495
        %v1497 = vrot.slane %v1383, %v1496
        %v1498 = vlaneseq
        %v1499 = vshrl.u32 %v1498, 7
        %v1500 = vsub.s32 0, %v1499
        %v1501 = vrot.slane %v1385, %v1500
        %v1502 = vlaneseq
        %v1503 = vshrl.u32 %v1502, 7
        %v1504 = vsub.s32 1, %v1503
        %v1505 = vrot.slane %v1385, %v1504
        %v1506 = vlaneseq
        %v1507 = vshrl.u32 %v1506, 7
        %v1508 = vsub.s32 2, %v1507
        %v1509 = vrot.slane %v1385, %v1508
        %v1510 = vlaneseq
        %v1511 = vshrl.u32 %v1510, 7
        %v1512 = vsub.s32 3, %v1511
        %v1513 = vrot.slane %v1385, %v1512
        %v1546 = vmul.f32 %v1389, %v1308
        %v1547 = vmul.f32 %v1393, %v1309
        %v1548 = vmul.f32 %v1397, %v1310
        %v1549 = vmul.f32 %v1401, %v1311
        %v1550 = vmul.f32 %v1405, %v1308
        %v1551 = vmul.f32 %v1409, %v1309
        %v1552 = vmul.f32 %v1413, %v1310
        %v1553 = vmul.f32 %v1417, %v1311
        %v1554 = vmul.f32 %v1421, %v1308
        %v1555 = vmul.f32 %v1425, %v1309
        %v1556 = vmul.f32 %v1429, %v1310
        %v1557 = vmul.f32 %v1433, %v1311
        %v1558 = vmul.f32 %v1437, %v1308
        %v1559 = vmul.f32 %v1441, %v1309
        %v1560 = vmul.f32 %v1445, %v1310
        %v1561 = vmul.f32 %v1449, %v1311
        %v1562 = vmul.f32 %v1453, %v1308
        %v1563 = vmul.f32 %v1457, %v1309
        %v1564 = vmul.f32 %v1461, %v1310
        %v1565 = vmul.f32 %v1465, %v1311
        %v1566 = vmul.f32 %v1469, %v1308
        %v1567 = vmul.f32 %v1473, %v1309
        %v1568 = vmul.f32 %v1477, %v1310
        %v1569 = vmul.f32 %v1481, %v1311
        %v1570 = vmul.f32 %v1485, %v1308
        %v1571 = vmul.f32 %v1489, %v1309
        %v1572 = vmul.f32 %v1493, %v1310
        %v1573 = vmul.f32 %v1497, %v1311
        %v1574 = vmul.f32 %v1501, %v1308
        %v1575 = vmul.f32 %v1505, %v1309
        %v1576 = vmul.f32 %v1509, %v1310
        %v1577 = vmul.f32 %v1513, %v1311
        %v1578 = vld [vmem:[%s5] sm:$0xff]
        %vm1579 = vcmask 523264
        %v1581 = vsel %vm1579, %v1578, 0
        %1583 = vmatprep.subr.mxu0 0.0
        %1584 = vmatpush1.msra.mxu0 0.0
        %1585 = vmatprep.subr.mxu0 0.0
        %1586 = vmatpush1.msra.mxu0 0.0
        %1587 = vmatprep.subr.mxu0 0.0
        %1588 = vmatpush1.msra.mxu0 0.0
        %1589 = vmatprep.subr.mxu0 0.0
        %1590 = vmatpush1.msra.mxu0 0.0
        %1591 = vmatprep.subr.mxu0 0.0
        %1592 = vmatpush1.msra.mxu0 0.0
        %1593 = vmatprep.subr.mxu0 0.0
        %1594 = vmatpush1.msra.mxu0 0.0
        %1595 = vmatprep.subr.mxu0 0.0
        %1596 = vmatpush1.msra.mxu0 0.0
        %1597 = vmatprep.subr.mxu0 0.0
        %1598 = vmatpush1.msra.mxu0 0.0
        %1599 = vmatprep.subr.mxu0 %v1575
        %1600 = vmatpush1.msra.mxu0 %v1574
        %1601 = vmatprep.subr.mxu0 %v1571
        %1602 = vmatpush1.msra.mxu0 %v1570
        %1603 = vmatprep.subr.mxu0 %v1567
        %1604 = vmatpush1.msra.mxu0 %v1566
        %1605 = vmatprep.subr.mxu0 %v1563
        %1606 = vmatpush1.msra.mxu0 %v1562
        %1607 = vmatprep.subr.mxu0 %v1559
        %1608 = vmatpush1.msra.mxu0 %v1558
        %1609 = vmatprep.subr.mxu0 %v1555
        %1610 = vmatpush1.msra.mxu0 %v1554
        %1611 = vmatprep.subr.mxu0 %v1551
        %1612 = vmatpush1.msra.mxu0 %v1550
        %1613 = vmatprep.subr.mxu0 %v1547
        %1614 = vmatpush1.msra.mxu0 %v1546
        %1615 = vmatprep.subr.mxu0 0.0
        %1616 = vmatpush2.msra.mxu0 0.0
        %1617 = vmatprep.subr.mxu0 0.0
        %1618 = vmatpush2.msra.mxu0 0.0
        %1619 = vmatprep.subr.mxu0 0.0
        %1620 = vmatpush2.msra.mxu0 0.0
        %1621 = vmatprep.subr.mxu0 0.0
        %1622 = vmatpush2.msra.mxu0 0.0
        %1623 = vmatprep.subr.mxu0 0.0
        %1624 = vmatpush2.msra.mxu0 0.0
        %1625 = vmatprep.subr.mxu0 0.0
        %1626 = vmatpush2.msra.mxu0 0.0
        %1627 = vmatprep.subr.mxu0 0.0
        %1628 = vmatpush2.msra.mxu0 0.0
        %1629 = vmatprep.subr.mxu0 0.0
        %1630 = vmatpush2.msra.mxu0 0.0
        %1631 = vmatprep.subr.mxu0 0.0
        %1632 = vmatpush2.msra.mxu0 0.0
        %1633 = vmatprep.subr.mxu0 0.0
        %1634 = vmatpush2.msra.mxu0 0.0
        %1635 = vmatprep.subr.mxu0 0.0
        %1636 = vmatpush2.msra.mxu0 0.0
        %1637 = vmatprep.subr.mxu0 0.0
        %1638 = vmatpush2.msra.mxu0 0.0
        %1639 = vmatprep.subr.mxu0 0.0
        %1640 = vmatpush2.msra.mxu0 0.0
        %1641 = vmatprep.subr.mxu0 0.0
        %1642 = vmatpush2.msra.mxu0 0.0
        %1643 = vmatprep.subr.mxu0 0.0
        %1644 = vmatpush2.msra.mxu0 0.0
        %1645 = vmatprep.subr.mxu0 0.0
        %1646 = vmatpush2.msra.mxu0 0.0
        %1647 = vmatprep.mubr.f32.mxu0 0.0
        %1648 = vmatmul.mubr.f32.gmra.mxu0 %v1581
        %v1649 = vpop.f32.mrf.mxu0
        %v1650 = vadd.f32 0.0, %v1649
        %v1651 = vpop.f32.mrf.mxu0
        %v1652 = vadd.f32 0.0, %v1651
        %1653 = vdwg.mxu0
        %1654 = vmatprep.subr.mxu0 0.0
        %1655 = vmatpush1.msra.mxu0 0.0
        %1656 = vmatprep.subr.mxu0 0.0
        %1657 = vmatpush1.msra.mxu0 0.0
        %1658 = vmatprep.subr.mxu0 0.0
        %1659 = vmatpush1.msra.mxu0 0.0
        %1660 = vmatprep.subr.mxu0 0.0
        %1661 = vmatpush1.msra.mxu0 0.0
        %1662 = vmatprep.subr.mxu0 0.0
        %1663 = vmatpush1.msra.mxu0 0.0
        %1664 = vmatprep.subr.mxu0 0.0
        %1665 = vmatpush1.msra.mxu0 0.0
        %1666 = vmatprep.subr.mxu0 0.0
        %1667 = vmatpush1.msra.mxu0 0.0
        %1668 = vmatprep.subr.mxu0 0.0
        %1669 = vmatpush1.msra.mxu0 0.0
        %1670 = vmatprep.subr.mxu0 %v1577
        %1671 = vmatpush1.msra.mxu0 %v1576
        %1672 = vmatprep.subr.mxu0 %v1573
        %1673 = vmatpush1.msra.mxu0 %v1572
        %1674 = vmatprep.subr.mxu0 %v1569
        %1675 = vmatpush1.msra.mxu0 %v1568
        %1676 = vmatprep.subr.mxu0 %v1565
        %1677 = vmatpush1.msra.mxu0 %v1564
        %1678 = vmatprep.subr.mxu0 %v1561
        %1679 = vmatpush1.msra.mxu0 %v1560
        %1680 = vmatprep.subr.mxu0 %v1557
        %1681 = vmatpush1.msra.mxu0 %v1556
        %1682 = vmatprep.subr.mxu0 %v1553
        %1683 = vmatpush1.msra.mxu0 %v1552
        %1684 = vmatprep.subr.mxu0 %v1549
        %1685 = vmatpush1.msra.mxu0 %v1548
        %1686 = vmatprep.subr.mxu0 0.0
        %1687 = vmatpush2.msra.mxu0 0.0
        %1688 = vmatprep.subr.mxu0 0.0
        %1689 = vmatpush2.msra.mxu0 0.0
        %1690 = vmatprep.subr.mxu0 0.0
        %1691 = vmatpush2.msra.mxu0 0.0
        %1692 = vmatprep.subr.mxu0 0.0
        %1693 = vmatpush2.msra.mxu0 0.0
        %1694 = vmatprep.subr.mxu0 0.0
        %1695 = vmatpush2.msra.mxu0 0.0
        %1696 = vmatprep.subr.mxu0 0.0
        %1697 = vmatpush2.msra.mxu0 0.0
        %1698 = vmatprep.subr.mxu0 0.0
        %1699 = vmatpush2.msra.mxu0 0.0
        %1700 = vmatprep.subr.mxu0 0.0
        %1701 = vmatpush2.msra.mxu0 0.0
        %1702 = vmatprep.subr.mxu0 0.0
        %1703 = vmatpush2.msra.mxu0 0.0
        %1704 = vmatprep.subr.mxu0 0.0
        %1705 = vmatpush2.msra.mxu0 0.0
        %1706 = vmatprep.subr.mxu0 0.0
        %1707 = vmatpush2.msra.mxu0 0.0
        %1708 = vmatprep.subr.mxu0 0.0
        %1709 = vmatpush2.msra.mxu0 0.0
        %1710 = vmatprep.subr.mxu0 0.0
        %1711 = vmatpush2.msra.mxu0 0.0
        %1712 = vmatprep.subr.mxu0 0.0
        %1713 = vmatpush2.msra.mxu0 0.0
        %1714 = vmatprep.subr.mxu0 0.0
        %1715 = vmatpush2.msra.mxu0 0.0
        %1716 = vmatprep.subr.mxu0 0.0
        %1717 = vmatpush2.msra.mxu0 0.0
        %1718 = vmatprep.mubr.f32.mxu0 0.0
        %1719 = vmatmul.mubr.f32.gmra.mxu0 %v1581
        %v1720 = vpop.f32.mrf.mxu0
        %v1721 = vadd.f32 0.0, %v1720
        %v1722 = vpop.f32.mrf.mxu0
        %v1723 = vadd.f32 0.0, %v1722
        %1724 = vdwg.mxu0
        %v1725 = vmul.f32 %v1650, %v696
        %v1726 = vmul.f32 %v1652, %v697
        %v1727 = vmul.f32 %v1721, %v698
        %v1728 = vmul.f32 %v1723, %v699
        %v1729 = vrot.slane %v1725, 4
        %v1730 = vadd.f32 %v1725, %v1729
        %v1731 = vrot.slane %v1730, 2
        %v1732 = vadd.f32 %v1730, %v1731
        %v1733 = vrot.slane %v1732, 1
        %v1734 = vadd.f32 %v1732, %v1733
        %v1735 = vrot.slane %v1726, 4
        %v1736 = vadd.f32 %v1726, %v1735
        %v1737 = vrot.slane %v1736, 2
        %v1738 = vadd.f32 %v1736, %v1737
        %v1739 = vrot.slane %v1738, 1
        %v1740 = vadd.f32 %v1738, %v1739
        %v1741 = vrot.slane %v1727, 4
        %v1742 = vadd.f32 %v1727, %v1741
        %v1743 = vrot.slane %v1742, 2
        %v1744 = vadd.f32 %v1742, %v1743
        %v1745 = vrot.slane %v1744, 1
        %v1746 = vadd.f32 %v1744, %v1745
        %v1747 = vrot.slane %v1728, 4
        %v1748 = vadd.f32 %v1728, %v1747
        %v1749 = vrot.slane %v1748, 2
        %v1750 = vadd.f32 %v1748, %v1749
        %v1751 = vrot.slane %v1750, 1
        %v1752 = vadd.f32 %v1750, %v1751
        %v1753 = vmul.f32 %v700, %v1006
        %v1754 = vmul.f32 %v701, %v1007
        %v1755 = vmul.f32 %v1753, %v1312
        %v1756 = vmul.f32 %v1754, %v1313
        %v1757 = vrcp.pop %v1755
        %v1758 = vrcp.pop %v1756
        %v1761 = vlaneseq
        %v1762 = vshrl.u32 %v1761, 7
        %v1763 = vsub.s32 0, %v1762
        %v1764 = vrot.slane %v1757, %v1763
        %v1765 = vlaneseq
        %v1766 = vshrl.u32 %v1765, 7
        %v1767 = vsub.s32 4, %v1766
        %v1768 = vrot.slane %v1757, %v1767
        %v1769 = vlaneseq
        %v1770 = vshrl.u32 %v1769, 7
        %v1771 = vsub.s32 0, %v1770
        %v1772 = vrot.slane %v1758, %v1771
        %v1773 = vlaneseq
        %v1774 = vshrl.u32 %v1773, 7
        %v1775 = vsub.s32 4, %v1774
        %v1776 = vrot.slane %v1758, %v1775
        %v1781 = vmul.f32 %v1734, %v1764
        %v1782 = vmul.f32 %v1740, %v1768
        %v1783 = vmul.f32 %v1746, %v1772
        %v1784 = vmul.f32 %v1752, %v1776
        %v1789 = vcombine.low %v1781, %v1782
        %v1790 = vcombine.low %v1783, %v1784
        %v1792 = vunpack.c.l.s4 1966171168
        %v1793 = vunpack.c.0.s8 %v1792
        %v1794 = vlaneseq
        %v1795 = vshrl.u32 %v1794, 7
        %v1796 = vsub.s32 %v1793, %v1795
        %v1797 = vrot.slane %v1789, %v1796
        %v1799 = vunpack.c.l.s4 1966171168
        %v1800 = vunpack.c.0.s8 %v1799
        %v1801 = vlaneseq
        %v1802 = vshrl.u32 %v1801, 7
        %v1803 = vsub.s32 %v1800, %v1802
        %v1804 = vrot.slane %v1790, %v1803
        %v1805 = vcombine.low %v1797, %v1804
        %v1807 = vunpack.c.l.s4 1966171168
        %v1808 = vunpack.c.0.s8 %v1807
        %v1809 = vlaneseq
        %v1810 = vshrl.u32 %v1809, 7
        %v1811 = vsub.s32 %v1808, %v1810
        %v1812 = vrot.slane %v1805, %v1811
        %v1814 = vlaneseq
        %vm1815 = vcmp.ge.s32.totalorder %v1814, 0
        %vm1816 = vcmp.lt.s32.totalorder %v1814, 512
        %vm1817 = vmand %vm1815, %vm1816
        %1818 = vst.msk [vmem:[%s281] sm:$0xf] %vm1817, %v1812
        %s1819 = sand.u32 %s163, 1
        %s1820 = scalar_lea.sflag [#allocation4], %s1819
        %s1821 = sand.u32 %s163, 1
        %s1822 = smul.addr %s1821, 4
        %s1823 = scalar_lea.vmem [#allocation7], %s1822
        // Predicated region
        $region53: #{tpu_custom_call.1} parent=43 // pred_check
          %p1824 = pneg %p173
        $region54: #{tpu_custom_call.1} parent=43 // pred_check_branch
          %1826 = sbr.rel (%p1824) target = $region56
        $region55: #{tpu_custom_call.1} parent=43 // pred_region
          %s1827 = smul.u32 4, %s24
          %s1829 = ssub.s32 64, 64
          %1830 = vsyncadd %s1820, %s1829
          %s1831 = smul.addr %s1827, 16
          %s1832 = scalar_lea.hbm %s6, %s1831
          %s1834 = sshll.u32 %s1823, 4
          %s1835 = int_to_ptr.vmem [resolvable:$true] %s1834
          %1837 = dma.vmem_to_hbm [thread:$0]  %s1835, 64, %s1832, %s1820
        $region56: #{tpu_custom_call.1} parent=43 // pred_fallthru
          _
      $region44: #{tpu_custom_call.1} parent=5 // pred_fallthru
        _
      %p1838 = scmp.le.s32.totalorder 2, %s19
      // Predicated region
      $region57: #{tpu_custom_call.1} parent=5 // pred_check
        %p1839 = pneg %p1838
      $region58: #{tpu_custom_call.1} parent=5 // pred_check_branch
        %1841 = sbr.rel (%p1839) target = $region60
      $region59: #{tpu_custom_call.1} parent=5 // pred_region
        %s1842 = ssub.s32 %s19, 2
        // Predicated region
        $region61: #{tpu_custom_call.1} parent=59 // pred_check
          %p1843 = pneg %p179
        $region62: #{tpu_custom_call.1} parent=59 // pred_check_branch
          %1845 = sbr.rel (%p1843) target = $region64
        $region63: #{tpu_custom_call.1} parent=59 // pred_region
          %s1846 = sand.u32 %s164, 1
          %s1847 = scalar_lea.sflag [#allocation4], %s1846
          %s1848 = sand.u32 %s164, 1
          %s1849 = smul.addr %s1848, 4
          %s1850 = scalar_lea.vmem [#allocation7], %s1849
          %1851 = dma.done %s1847, 64
        $region64: #{tpu_custom_call.1} parent=59 // pred_fallthru
          _
      $region60: #{tpu_custom_call.1} parent=5 // pred_fallthru
        _
    $region6: #{tpu_custom_call.1} parent=1 // loop_footer
      %s23 = sadd.s32 1, %s19
    $region7: #{tpu_custom_call.1} parent=1 // loop_footer_branch
      %18 = sbr.rel target = $region3
    $region8: #{tpu_custom_call.1} parent=1 // loop_exit
      _
    %1852 = vsyncpa [#allocation3], 1
    %s1853 = scalar_lea.sflag [#allocation3], 1
    %1854 = vsyncpa %s1853, 1
    %1855 = vsyncpa [#allocation4], 1
    %s1856 = scalar_lea.sflag [#allocation4], 1
    %1857 = vsyncpa %s1856, 1
    %1858 = vsyncpa [#allocation5], 1
    %s1859 = scalar_lea.sflag [#allocation5], 1
    %1860 = vsyncpa %s1859, 1

</llo_original>
